<compile_context>
chip_gen: v6e
topology: v6e:2x2x1
jax: 0.10.0
libtpu: 0.0.40
codegen_flags: <defaults>
</compile_context>

<pallas_src>
import jax
import jax.numpy as jnp
from jax.experimental import pallas as pl
from jax.experimental.pallas import tpu as pltpu


LANE = 128  # pad the embedding output to full lanes -> unmasked vst


def _round_up(n, m):
    return ((n + m - 1) // m) * m


def _pick_row_tile(batch):
    """Largest row tile (multiple of 8, <=256) dividing batch; else full batch."""
    if batch % 8 != 0:
        return batch
    for tm in (256, 128, 64, 32, 16, 8):
        if batch % tm == 0:
            return tm
    return batch


# ----------------------------- Pallas kernel ------------------------------- #
def _make_triplet_mlp_kernel(n_legs):
    """Fused 2-layer MLP over n_legs inputs sharing one set of weights."""

    def kernel(*refs):
        x_refs = refs[:n_legs]
        w1_ref, b1_ref, w2_ref, b2_ref = refs[n_legs:n_legs + 4]
        o_refs = refs[n_legs + 4:]

        w1 = w1_ref[...]   # bf16, resident in VMEM across legs / grid steps
        b1 = b1_ref[...]   # f32
        w2 = w2_ref[...]   # bf16, lane-padded
        b2 = b2_ref[...]   # f32, lane-padded

        for x_ref, o_ref in zip(x_refs, o_refs):
            # bf16 MXU inputs, f32 accumulation.
            h = jnp.dot(x_ref[...].astype(jnp.bfloat16), w1,
                        preferred_element_type=jnp.float32)
            h = jnp.maximum(h + b1, 0.0)                      # bias + ReLU (VPU)
            out = jnp.dot(h.astype(jnp.bfloat16), w2,
                          preferred_element_type=jnp.float32) + b2
            o_ref[...] = out.astype(o_ref.dtype)

    return kernel


def triplet_mlp_embed(xs, w1_bf16, b1, w2_bf16_pad, b2_pad, emb_dim):
    """xs: tuple of (B, D) f32 arrays; returns tuple of (B, emb_dim) f32."""
    n_legs = len(xs)
    B, D = xs[0].shape
    HID = w1_bf16.shape[1]
    Ep = w2_bf16_pad.shape[1]

    tm = _pick_row_tile(B)
    grid_m = B // tm

    x_spec = pl.BlockSpec((tm, D), lambda i: (i, 0))
    o_spec = pl.BlockSpec((tm, Ep), lambda i: (i, 0))
    # Weight / bias blocks are full-extent and map to the same block every grid
    # step -> fetched from HBM once and kept resident in VMEM.
    w1_spec = pl.BlockSpec((D, HID), lambda i: (0, 0))
    b1_spec = pl.BlockSpec((1, HID), lambda i: (0, 0))
    w2_spec = pl.BlockSpec((HID, Ep), lambda i: (0, 0))
    b2_spec = pl.BlockSpec((1, Ep), lambda i: (0, 0))

    flops = n_legs * (2 * B * D * HID + 2 * B * HID * emb_dim)
    bytes_accessed = (n_legs * B * D * 4           # activations (f32)
                      + D * HID * 2 + HID * 4      # W1 (bf16) + b1 (f32)
                      + HID * Ep * 2 + Ep * 4      # W2 (bf16) + b2 (f32)
                      + n_legs * B * Ep * 4)       # outputs (f32)

    outs = pl.pallas_call(
        _make_triplet_mlp_kernel(n_legs),
        out_shape=tuple(jax.ShapeDtypeStruct((B, Ep), jnp.float32)
                        for _ in range(n_legs)),
        grid=(grid_m,),
        in_specs=[x_spec] * n_legs + [w1_spec, b1_spec, w2_spec, b2_spec],
        out_specs=tuple(o_spec for _ in range(n_legs)),
        compiler_params=pltpu.CompilerParams(
            dimension_semantics=("parallel",),   # rows shard across v7x's 2 TCs
        ),
        cost_estimate=pl.CostEstimate(
            flops=flops, transcendentals=0, bytes_accessed=bytes_accessed),
    )(*xs, w1_bf16, b1, w2_bf16_pad, b2_pad)

    # Slice off the lane padding (module contract returns raw embeddings).
    return tuple(o[:, :emb_dim] for o in outs)


# ------------------------------ Module glue -------------------------------- #
class EmbeddingNet:
    """Deterministic 2-layer MLP embedding net (weights shared across legs)."""

    def __init__(self, in_dim, hidden_dim, emb_dim, key):
        k1, k2 = jax.random.split(key)
        self.in_dim = in_dim
        self.hidden_dim = hidden_dim
        self.emb_dim = emb_dim
        s1 = 1.0 / jnp.sqrt(jnp.float32(in_dim))
        s2 = 1.0 / jnp.sqrt(jnp.float32(hidden_dim))

        # f32 master weights (reference / training) + bf16 streaming copies.
        self.w1_f32 = jax.random.normal(k1, (in_dim, hidden_dim), jnp.float32) * s1
        self.b1 = jnp.zeros((1, hidden_dim), jnp.float32)
        self.w2_f32 = jax.random.normal(k2, (hidden_dim, emb_dim), jnp.float32) * s2
        self.b2 = jnp.zeros((1, emb_dim), jnp.float32)

        e_pad = _round_up(emb_dim, LANE)
        self.w1_bf16 = self.w1_f32.astype(jnp.bfloat16)
        self.w2p_bf16 = jnp.pad(
            self.w2_f32, ((0, 0), (0, e_pad - emb_dim))).astype(jnp.bfloat16)
        self.b2p = jnp.pad(self.b2, ((0, 0), (0, e_pad - emb_dim)))

    def embed_legs(self, xs_flat):
        return triplet_mlp_embed(xs_flat, self.w1_bf16, self.b1,
                                 self.w2p_bf16, self.b2p, self.emb_dim)

    def __call__(self, x):
        x_flat = x.reshape(x.shape[0], -1).astype(jnp.float32)
        return self.embed_legs((x_flat,))[0]


class TripletNet:
    """Mirrors PyTorch TripletNet.forward; the three shared-weight legs run
    fused in a single Pallas kernel (weights fetched from HBM once)."""

    def __init__(self, embedding_net):
        self.embedding_net = embedding_net

    def forward(self, x1, x2, x3):
        xs = tuple(x.reshape(x.shape[0], -1).astype(jnp.float32)
                   for x in (x1, x2, x3))
        output1, output2, output3 = self.embedding_net.embed_legs(xs)
        return (output1, output2, output3)

    __call__ = forward


# --------------------------------- Main ------------------------------------ #
if __name__ == "__main__":
    key = jax.random.PRNGKey(0)
    k_param, k1, k2, k3 = jax.random.split(key, 4)

    B, C, H, W = 2, 4, 16, 16          # NCHW, like PyTorch
    D = C * H * W                      # 1024
    HID, E = 128, 32

    emb_net = EmbeddingNet(D, HID, E, k_param)
    net = TripletNet(emb_net)

    x1 = jax.random.normal(k1, (B, C, H, W), jnp.float32)
    x2 = jax.random.normal(k2, (B, C, H, W), jnp.float32)
    x3 = jax.random.normal(k3, (B, C, H, W), jnp.float32)

    o1, o2, o3 = net(x1, x2, x3)
    jax.block_until_ready((o1, o2, o3))

    # Plain-JAX f32 reference (HIGHEST precision so the reference matmul is not
    # itself silently bf16 on TPU).  The kernel streams bf16 weights, so use a
    # tolerance that covers bf16 input quantization.
    def ref_embed(x):
        xf = x.reshape(x.shape[0], -1)
        h = jnp.maximum(
            jnp.dot(xf, emb_net.w1_f32, precision=jax.lax.Precision.HIGHEST)
            + emb_net.b1, 0.0)
        return (jnp.dot(h, emb_net.w2_f32, precision=jax.lax.Precision.HIGHEST)
                + emb_net.b2)

    for out, x in ((o1, x1), (o2, x2), (o3, x3)):
        assert out.shape == (B, E)
        assert jnp.allclose(out, ref_embed(x), atol=2e-2, rtol=2e-2)

    print("KERNEL_OK")
</pallas_src>

<mosaic_0001>
module attributes {stable_mosaic.version = 11 : i64} {
  func.func @kernel(%arg0: i32, %arg1: memref<2x1024xf32, #tpu.memory_space<vmem>>, %arg2: memref<2x1024xf32, #tpu.memory_space<vmem>>, %arg3: memref<2x1024xf32, #tpu.memory_space<vmem>>, %arg4: memref<1024x128xbf16, #tpu.memory_space<vmem>>, %arg5: memref<1x128xf32, #tpu.memory_space<vmem>>, %arg6: memref<128x128xbf16, #tpu.memory_space<vmem>>, %arg7: memref<1x128xf32, #tpu.memory_space<vmem>>, %arg8: memref<2x128xf32, #tpu.memory_space<vmem>>, %arg9: memref<2x128xf32, #tpu.memory_space<vmem>>, %arg10: memref<2x128xf32, #tpu.memory_space<vmem>>) attributes {dimension_semantics = [#tpu.dimension_semantics<parallel>], iteration_bounds = array<i64: 1>, scalar_prefetch = 0 : i64, scratch_operands = 0 : i64, tpu.core_type = #tpu.core_type<tc>, window_params = [{transform_indices = @transform_0, window_bounds = array<i64: 2, 1024>}, {transform_indices = @transform_1, window_bounds = array<i64: 2, 1024>}, {transform_indices = @transform_2, window_bounds = array<i64: 2, 1024>}, {pipeline_mode = #tpu.pipeline_mode<synchronous>, transform_indices = @transform_3, window_bounds = array<i64: 1024, 128>}, {pipeline_mode = #tpu.pipeline_mode<synchronous>, transform_indices = @transform_4, window_bounds = array<i64: 1, 128>}, {pipeline_mode = #tpu.pipeline_mode<synchronous>, transform_indices = @transform_5, window_bounds = array<i64: 128, 128>}, {pipeline_mode = #tpu.pipeline_mode<synchronous>, transform_indices = @transform_6, window_bounds = array<i64: 1, 128>}, {transform_indices = @transform_7, window_bounds = array<i64: 2, 128>}, {transform_indices = @transform_8, window_bounds = array<i64: 2, 128>}, {transform_indices = @transform_9, window_bounds = array<i64: 2, 128>}]} {
    %c0 = arith.constant 0 : index
    %c0_0 = arith.constant 0 : index
    %0 = vector.load %arg4[%c0, %c0_0] : memref<1024x128xbf16, #tpu.memory_space<vmem>>, vector<1024x128xbf16>
    %c0_1 = arith.constant 0 : index
    %c0_2 = arith.constant 0 : index
    %1 = vector.load %arg5[%c0_1, %c0_2] : memref<1x128xf32, #tpu.memory_space<vmem>>, vector<1x128xf32>
    %c0_3 = arith.constant 0 : index
    %c0_4 = arith.constant 0 : index
    %2 = vector.load %arg6[%c0_3, %c0_4] : memref<128x128xbf16, #tpu.memory_space<vmem>>, vector<128x128xbf16>
    %c0_5 = arith.constant 0 : index
    %c0_6 = arith.constant 0 : index
    %3 = vector.load %arg7[%c0_5, %c0_6] : memref<1x128xf32, #tpu.memory_space<vmem>>, vector<1x128xf32>
    %c0_7 = arith.constant 0 : index
    %c0_8 = arith.constant 0 : index
    %4 = vector.load %arg1[%c0_7, %c0_8] : memref<2x1024xf32, #tpu.memory_space<vmem>>, vector<2x1024xf32>
    %5 = arith.truncf %4 : vector<2x1024xf32> to vector<2x1024xbf16>
    %cst = arith.constant dense<0.000000e+00> : vector<2x128xf32>
    %6 = tpu.matmul %5, %0, %cst {dimension_numbers = #tpu.dot_dimension_numbers<[1], [0], [0], [1], [0, 0, 1, 1], [], []>} : vector<2x1024xbf16>, vector<1024x128xbf16>, vector<2x128xf32> -> vector<2x128xf32>
    %7 = vector.broadcast %1 : vector<1x128xf32> to vector<2x128xf32>
    %8 = arith.addf %6, %7 : vector<2x128xf32>
    %cst_9 = arith.constant 0.000000e+00 : f32
    %9 = vector.broadcast %cst_9 : f32 to vector<2x128xf32>
    %10 = arith.maximumf %8, %9 : vector<2x128xf32>
    %11 = arith.truncf %10 : vector<2x128xf32> to vector<2x128xbf16>
    %cst_10 = arith.constant dense<0.000000e+00> : vector<2x128xf32>
    %12 = tpu.matmul %11, %2, %cst_10 {dimension_numbers = #tpu.dot_dimension_numbers<[1], [0], [0], [1], [0, 0, 1, 1], [], []>} : vector<2x128xbf16>, vector<128x128xbf16>, vector<2x128xf32> -> vector<2x128xf32>
    %13 = vector.broadcast %3 : vector<1x128xf32> to vector<2x128xf32>
    %14 = arith.addf %12, %13 : vector<2x128xf32>
    %c0_11 = arith.constant 0 : index
    %c0_12 = arith.constant 0 : index
    %15 = vector.load %arg8[%c0_11, %c0_12] : memref<2x128xf32, #tpu.memory_space<vmem>>, vector<2x128xf32>
    tpu.vector_store %arg8[%c0_11, %c0_12], %14 {strides = array<i32>} : memref<2x128xf32, #tpu.memory_space<vmem>>, vector<2x128xf32>,
    %c0_13 = arith.constant 0 : index
    %c0_14 = arith.constant 0 : index
    %16 = vector.load %arg2[%c0_13, %c0_14] : memref<2x1024xf32, #tpu.memory_space<vmem>>, vector<2x1024xf32>
    %17 = arith.truncf %16 : vector<2x1024xf32> to vector<2x1024xbf16>
    %cst_15 = arith.constant dense<0.000000e+00> : vector<2x128xf32>
    %18 = tpu.matmul %17, %0, %cst_15 {dimension_numbers = #tpu.dot_dimension_numbers<[1], [0], [0], [1], [0, 0, 1, 1], [], []>} : vector<2x1024xbf16>, vector<1024x128xbf16>, vector<2x128xf32> -> vector<2x128xf32>
    %19 = vector.broadcast %1 : vector<1x128xf32> to vector<2x128xf32>
    %20 = arith.addf %18, %19 : vector<2x128xf32>
    %cst_16 = arith.constant 0.000000e+00 : f32
    %21 = vector.broadcast %cst_16 : f32 to vector<2x128xf32>
    %22 = arith.maximumf %20, %21 : vector<2x128xf32>
    %23 = arith.truncf %22 : vector<2x128xf32> to vector<2x128xbf16>
    %cst_17 = arith.constant dense<0.000000e+00> : vector<2x128xf32>
    %24 = tpu.matmul %23, %2, %cst_17 {dimension_numbers = #tpu.dot_dimension_numbers<[1], [0], [0], [1], [0, 0, 1, 1], [], []>} : vector<2x128xbf16>, vector<128x128xbf16>, vector<2x128xf32> -> vector<2x128xf32>
    %25 = vector.broadcast %3 : vector<1x128xf32> to vector<2x128xf32>
    %26 = arith.addf %24, %25 : vector<2x128xf32>
    %c0_18 = arith.constant 0 : index
    %c0_19 = arith.constant 0 : index
    %27 = vector.load %arg9[%c0_18, %c0_19] : memref<2x128xf32, #tpu.memory_space<vmem>>, vector<2x128xf32>
    tpu.vector_store %arg9[%c0_18, %c0_19], %26 {strides = array<i32>} : memref<2x128xf32, #tpu.memory_space<vmem>>, vector<2x128xf32>,
    %c0_20 = arith.constant 0 : index
    %c0_21 = arith.constant 0 : index
    %28 = vector.load %arg3[%c0_20, %c0_21] : memref<2x1024xf32, #tpu.memory_space<vmem>>, vector<2x1024xf32>
    %29 = arith.truncf %28 : vector<2x1024xf32> to vector<2x1024xbf16>
    %cst_22 = arith.constant dense<0.000000e+00> : vector<2x128xf32>
    %30 = tpu.matmul %29, %0, %cst_22 {dimension_numbers = #tpu.dot_dimension_numbers<[1], [0], [0], [1], [0, 0, 1, 1], [], []>} : vector<2x1024xbf16>, vector<1024x128xbf16>, vector<2x128xf32> -> vector<2x128xf32>
    %31 = vector.broadcast %1 : vector<1x128xf32> to vector<2x128xf32>
    %32 = arith.addf %30, %31 : vector<2x128xf32>
    %cst_23 = arith.constant 0.000000e+00 : f32
    %33 = vector.broadcast %cst_23 : f32 to vector<2x128xf32>
    %34 = arith.maximumf %32, %33 : vector<2x128xf32>
    %35 = arith.truncf %34 : vector<2x128xf32> to vector<2x128xbf16>
    %cst_24 = arith.constant dense<0.000000e+00> : vector<2x128xf32>
    %36 = tpu.matmul %35, %2, %cst_24 {dimension_numbers = #tpu.dot_dimension_numbers<[1], [0], [0], [1], [0, 0, 1, 1], [], []>} : vector<2x128xbf16>, vector<128x128xbf16>, vector<2x128xf32> -> vector<2x128xf32>
    %37 = vector.broadcast %3 : vector<1x128xf32> to vector<2x128xf32>
    %38 = arith.addf %36, %37 : vector<2x128xf32>
    %c0_25 = arith.constant 0 : index
    %c0_26 = arith.constant 0 : index
    %39 = vector.load %arg10[%c0_25, %c0_26] : memref<2x128xf32, #tpu.memory_space<vmem>>, vector<2x128xf32>
    tpu.vector_store %arg10[%c0_25, %c0_26], %38 {strides = array<i32>} : memref<2x128xf32, #tpu.memory_space<vmem>>, vector<2x128xf32>,
    return
  }
  func.func @transform_0(%arg0: i32) -> (i32, i32) {
    %c0_i32 = arith.constant 0 : i32
    %c0_i32_0 = arith.constant 0 : i32
    return %arg0, %c0_i32 : i32, i32
  }
  func.func @transform_1(%arg0: i32) -> (i32, i32) {
    %c0_i32 = arith.constant 0 : i32
    %c0_i32_0 = arith.constant 0 : i32
    return %arg0, %c0_i32 : i32, i32
  }
  func.func @transform_2(%arg0: i32) -> (i32, i32) {
    %c0_i32 = arith.constant 0 : i32
    %c0_i32_0 = arith.constant 0 : i32
    return %arg0, %c0_i32 : i32, i32
  }
  func.func @transform_3(%arg0: i32) -> (i32, i32) {
    %c0_i32 = arith.constant 0 : i32
    %c0_i32_0 = arith.constant 0 : i32
    %c0_i32_1 = arith.constant 0 : i32
    return %c0_i32, %c0_i32_0 : i32, i32
  }
  func.func @transform_4(%arg0: i32) -> (i32, i32) {
    %c0_i32 = arith.constant 0 : i32
    %c0_i32_0 = arith.constant 0 : i32
    %c0_i32_1 = arith.constant 0 : i32
    return %c0_i32, %c0_i32_0 : i32, i32
  }
  func.func @transform_5(%arg0: i32) -> (i32, i32) {
    %c0_i32 = arith.constant 0 : i32
    %c0_i32_0 = arith.constant 0 : i32
    %c0_i32_1 = arith.constant 0 : i32
    return %c0_i32, %c0_i32_0 : i32, i32
  }
  func.func @transform_6(%arg0: i32) -> (i32, i32) {
    %c0_i32 = arith.constant 0 : i32
    %c0_i32_0 = arith.constant 0 : i32
    %c0_i32_1 = arith.constant 0 : i32
    return %c0_i32, %c0_i32_0 : i32, i32
  }
  func.func @transform_7(%arg0: i32) -> (i32, i32) {
    %c0_i32 = arith.constant 0 : i32
    %c0_i32_0 = arith.constant 0 : i32
    return %arg0, %c0_i32 : i32, i32
  }
  func.func @transform_8(%arg0: i32) -> (i32, i32) {
    %c0_i32 = arith.constant 0 : i32
    %c0_i32_0 = arith.constant 0 : i32
    return %arg0, %c0_i32 : i32, i32
  }
  func.func @transform_9(%arg0: i32) -> (i32, i32) {
    %c0_i32 = arith.constant 0 : i32
    %c0_i32_0 = arith.constant 0 : i32
    return %arg0, %c0_i32 : i32, i32
  }
}

</mosaic_0001>

<llo_original>
// kernel: tpu_custom_call.1
$region0: #{tpu_custom_call.1}
  #allocation0 [shape = 'u32[]', space=smem, size = 0x4, offset = 0x4, fixed_abs, tag = 'smem constant byte address 0x4 - core index']
  #allocation1 [shape = 'u32[144,128]{1,0:T(1,128)}', space=vmem, size = 0x12000, scoped, tag = 'internal scratch']
  %s0 = inlined_call_operand.hbm [shape: f32[2,1024], index: 0, kind: input, shape index: {}]
  %s1 = inlined_call_operand.hbm [shape: f32[2,1024], index: 1, kind: input, shape index: {}]
  %s2 = inlined_call_operand.hbm [shape: f32[2,1024], index: 2, kind: input, shape index: {}]
  %s3 = inlined_call_operand.hbm [shape: bf16[1024,128], index: 3, kind: input, shape index: {}]
  %s4 = inlined_call_operand.vmem [shape: f32[1,128], index: 4, kind: input, shape index: {}]
  %s5 = inlined_call_operand.hbm [shape: bf16[128,128], index: 5, kind: input, shape index: {}]
  %s6 = inlined_call_operand.vmem [shape: f32[1,128], index: 6, kind: input, shape index: {}]
  %s7 = inlined_call_operand.hbm [shape: f32[2,128], index: 7, kind: output, shape index: {0}]
  %s8 = inlined_call_operand.hbm [shape: f32[2,128], index: 8, kind: output, shape index: {1}]
  %s9 = inlined_call_operand.hbm [shape: f32[2,128], index: 9, kind: output, shape index: {2}]
  %10 = xla_tuple %s7, %s8, %s9
  %s11 = sld [smem:[#allocation0]]
  $region74: #{tpu_custom_call.1} parent=0
    _
  %s13 = ssub.s32 1, %s11
  %s14 = scalar_select 0, %s13, %s11
  $region1: #{tpu_custom_call.1} parent=0
    #allocation2 [shape = 'u8[8192]{0}', space=vmem, size = 0x2000, scoped, tag = 'input window, operand 0, single buffered']
    #allocation3 [shape = 's32[1]{0}', space=sflag, size = 0x4, scoped, tag = 'scoped memory for tpu_custom_call.1']
    #allocation4 [shape = 's32[1]{0}', space=sflag, size = 0x4, scoped, tag = 'scoped memory for tpu_custom_call.1']
    #allocation5 [shape = 'u8[8192]{0}', space=vmem, size = 0x2000, scoped, tag = 'input window, operand 1, single buffered']
    #allocation6 [shape = 's32[1]{0}', space=sflag, size = 0x4, scoped, tag = 'scoped memory for tpu_custom_call.1']
    #allocation7 [shape = 'u8[8192]{0}', space=vmem, size = 0x2000, scoped, tag = 'input window, operand 2, single buffered']
    #allocation8 [shape = 'u8[262144]{0}', space=vmem, size = 0x40000, scoped, tag = 'input window, operand 3, single buffered']
    #allocation9 [shape = 's32[1]{0}', space=sflag, size = 0x4, scoped, tag = 'scoped memory for tpu_custom_call.1']
    #allocation10 [shape = 'u8[32768]{0}', space=vmem, size = 0x8000, scoped, tag = 'input window, operand 5, single buffered']
    #allocation11 [shape = 'u8[1024]{0}', space=vmem, size = 0x400, scoped, tag = 'output window, operand 0, single buffered']
    #allocation12 [shape = 'u8[1024]{0}', space=vmem, size = 0x400, scoped, tag = 'output window, operand 1, single buffered']
    #allocation13 [shape = 's32[1]{0}', space=sflag, size = 0x4, scoped, tag = 'scoped memory for tpu_custom_call.1']
    #allocation14 [shape = 'u8[1024]{0}', space=vmem, size = 0x400, scoped, tag = 'output window, operand 2, single buffered']
    %15 = vsyncpa [#allocation3], 0
    %16 = vsyncpa [#allocation6], 0
    %17 = vsyncpa [#allocation9], 0
    %18 = vsyncpa [#allocation4], 0
    %19 = vsyncpa [#allocation13], 0
    // Predicated region
    $region2: #{tpu_custom_call.1} parent=1 // pred_check
      _
    $region3: #{tpu_custom_call.1} parent=1 // pred_check_branch
      %21 = sbr.rel (0) target = $region5
    $region4: #{tpu_custom_call.1} parent=1 // pred_region
      %s23 = ssub.s32 256, 256
      %24 = vsyncadd [#allocation3], %s23
      %s26 = sshll.u32 [#allocation2], 4
      %s27 = int_to_ptr.vmem [resolvable:$true] %s26
      %29 = dma.hbm_to_vmem [thread:$0]  %s0, 256, %s27, [#allocation3]
    $region5: #{tpu_custom_call.1} parent=1 // pred_fallthru
      _
    // Predicated region
    $region6: #{tpu_custom_call.1} parent=1 // pred_check
      _
    $region7: #{tpu_custom_call.1} parent=1 // pred_check_branch
      %31 = sbr.rel (0) target = $region9
    $region8: #{tpu_custom_call.1} parent=1 // pred_region
      %s33 = ssub.s32 256, 256
      %34 = vsyncadd [#allocation6], %s33
      %s36 = sshll.u32 [#allocation5], 4
      %s37 = int_to_ptr.vmem [resolvable:$true] %s36
      %39 = dma.hbm_to_vmem [thread:$0]  %s1, 256, %s37, [#allocation6]
    $region9: #{tpu_custom_call.1} parent=1 // pred_fallthru
      _
    // Predicated region
    $region10: #{tpu_custom_call.1} parent=1 // pred_check
      _
    $region11: #{tpu_custom_call.1} parent=1 // pred_check_branch
      %41 = sbr.rel (0) target = $region13
    $region12: #{tpu_custom_call.1} parent=1 // pred_region
      %s43 = ssub.s32 256, 256
      %44 = vsyncadd [#allocation6], %s43
      %s46 = sshll.u32 [#allocation7], 4
      %s47 = int_to_ptr.vmem [resolvable:$true] %s46
      %49 = dma.hbm_to_vmem [thread:$0]  %s2, 256, %s47, [#allocation6]
    $region13: #{tpu_custom_call.1} parent=1 // pred_fallthru
      _
    // Predicated region
    $region14: #{tpu_custom_call.1} parent=1 // pred_check
      _
    $region15: #{tpu_custom_call.1} parent=1 // pred_check_branch
      %51 = sbr.rel (0) target = $region17
    $region16: #{tpu_custom_call.1} parent=1 // pred_region
      %s53 = ssub.s32 8192, 8192
      %54 = vsyncadd [#allocation9], %s53
      %s55 = sshll.u32 [#allocation8], 4
      %s56 = int_to_ptr.vmem [resolvable:$true] %s55
      %61 = dma.hbm_to_vmem [thread:$0]  %s3, 8192, %s56, [#allocation9], 64, 64, 4
    $region17: #{tpu_custom_call.1} parent=1 // pred_fallthru
      _
    // Predicated region
    $region18: #{tpu_custom_call.1} parent=1 // pred_check
      _
    $region19: #{tpu_custom_call.1} parent=1 // pred_check_branch
      %63 = sbr.rel (0) target = $region21
    $region20: #{tpu_custom_call.1} parent=1 // pred_region
      _
    $region21: #{tpu_custom_call.1} parent=1 // pred_fallthru
      _
    // Predicated region
    $region22: #{tpu_custom_call.1} parent=1 // pred_check
      _
    $region23: #{tpu_custom_call.1} parent=1 // pred_check_branch
      %65 = sbr.rel (0) target = $region25
    $region24: #{tpu_custom_call.1} parent=1 // pred_region
      %s67 = ssub.s32 1024, 1024
      %68 = vsyncadd [#allocation9], %s67
      %s69 = sshll.u32 [#allocation10], 4
      %s70 = int_to_ptr.vmem [resolvable:$true] %s69
      %75 = dma.hbm_to_vmem [thread:$0]  %s5, 1024, %s70, [#allocation9], 64, 64, 4
    $region25: #{tpu_custom_call.1} parent=1 // pred_fallthru
      _
    // Predicated region
    $region26: #{tpu_custom_call.1} parent=1 // pred_check
      _
    $region27: #{tpu_custom_call.1} parent=1 // pred_check_branch
      %77 = sbr.rel (0) target = $region29
    $region28: #{tpu_custom_call.1} parent=1 // pred_region
      _
    $region29: #{tpu_custom_call.1} parent=1 // pred_fallthru
      _
    // Predicated region
    $region30: #{tpu_custom_call.1} parent=1 // pred_check
      _
    $region31: #{tpu_custom_call.1} parent=1 // pred_check_branch
      %79 = sbr.rel (0) target = $region33
    $region32: #{tpu_custom_call.1} parent=1 // pred_region
      %80 = dma.done [#allocation3], 256
    $region33: #{tpu_custom_call.1} parent=1 // pred_fallthru
      _
    // Predicated region
    $region34: #{tpu_custom_call.1} parent=1 // pred_check
      _
    $region35: #{tpu_custom_call.1} parent=1 // pred_check_branch
      %82 = sbr.rel (0) target = $region37
    $region36: #{tpu_custom_call.1} parent=1 // pred_region
      %83 = dma.done [#allocation6], 256
    $region37: #{tpu_custom_call.1} parent=1 // pred_fallthru
      _
    // Predicated region
    $region38: #{tpu_custom_call.1} parent=1 // pred_check
      _
    $region39: #{tpu_custom_call.1} parent=1 // pred_check_branch
      %85 = sbr.rel (0) target = $region41
    $region40: #{tpu_custom_call.1} parent=1 // pred_region
      %86 = dma.done [#allocation6], 256
    $region41: #{tpu_custom_call.1} parent=1 // pred_fallthru
      _
    // Predicated region
    $region42: #{tpu_custom_call.1} parent=1 // pred_check
      _
    $region43: #{tpu_custom_call.1} parent=1 // pred_check_branch
      %88 = sbr.rel (0) target = $region45
    $region44: #{tpu_custom_call.1} parent=1 // pred_region
      %89 = dma.done [#allocation9], 8192
    $region45: #{tpu_custom_call.1} parent=1 // pred_fallthru
      _
    // Predicated region
    $region46: #{tpu_custom_call.1} parent=1 // pred_check
      _
    $region47: #{tpu_custom_call.1} parent=1 // pred_check_branch
      %91 = sbr.rel (0) target = $region49
    $region48: #{tpu_custom_call.1} parent=1 // pred_region
      %92 = dma.done [#allocation9], 1024
    $region49: #{tpu_custom_call.1} parent=1 // pred_fallthru
      _
    %v94 = vld [vmem:[#allocation8] sm:$0xf]
    %v95 = vld [vmem:[#allocation8 + $0x4] sm:$0xf]
    %v96 = vld [vmem:[#allocation8 + $0x8] sm:$0xf]
    %v97 = vld [vmem:[#allocation8 + $0xc] sm:$0xf]
    %v98 = vld [vmem:[#allocation8 + $0x10] sm:$0xf]
    %v99 = vld [vmem:[#allocation8 + $0x14] sm:$0xf]
    %v100 = vld [vmem:[#allocation8 + $0x18] sm:$0xf]
    %v101 = vld [vmem:[#allocation8 + $0x1c] sm:$0xf]
    %v102 = vld [vmem:[#allocation8 + $0x20] sm:$0xf]
    %v103 = vld [vmem:[#allocation8 + $0x24] sm:$0xf]
    %v104 = vld [vmem:[#allocation8 + $0x28] sm:$0xf]
    %v105 = vld [vmem:[#allocation8 + $0x2c] sm:$0xf]
    %v106 = vld [vmem:[#allocation8 + $0x30] sm:$0xf]
    %v107 = vld [vmem:[#allocation8 + $0x34] sm:$0xf]
    %v108 = vld [vmem:[#allocation8 + $0x38] sm:$0xf]
    %v109 = vld [vmem:[#allocation8 + $0x3c] sm:$0xf]
    %v110 = vld [vmem:[#allocation8 + $0x40] sm:$0xf]
    %v111 = vld [vmem:[#allocation8 + $0x44] sm:$0xf]
    %v112 = vld [vmem:[#allocation8 + $0x48] sm:$0xf]
    %v113 = vld [vmem:[#allocation8 + $0x4c] sm:$0xf]
    %v114 = vld [vmem:[#allocation8 + $0x50] sm:$0xf]
    %v115 = vld [vmem:[#allocation8 + $0x54] sm:$0xf]
    %v116 = vld [vmem:[#allocation8 + $0x58] sm:$0xf]
    %v117 = vld [vmem:[#allocation8 + $0x5c] sm:$0xf]
    %v118 = vld [vmem:[#allocation8 + $0x60] sm:$0xf]
    %v119 = vld [vmem:[#allocation8 + $0x64] sm:$0xf]
    %v120 = vld [vmem:[#allocation8 + $0x68] sm:$0xf]
    %v121 = vld [vmem:[#allocation8 + $0x6c] sm:$0xf]
    %v122 = vld [vmem:[#allocation8 + $0x70] sm:$0xf]
    %v123 = vld [vmem:[#allocation8 + $0x74] sm:$0xf]
    %v124 = vld [vmem:[#allocation8 + $0x78] sm:$0xf]
    %v125 = vld [vmem:[#allocation8 + $0x7c] sm:$0xf]
    %v126 = vld [vmem:[#allocation8 + $0x80] sm:$0xf]
    %v127 = vld [vmem:[#allocation8 + $0x84] sm:$0xf]
    %v128 = vld [vmem:[#allocation8 + $0x88] sm:$0xf]
    %v129 = vld [vmem:[#allocation8 + $0x8c] sm:$0xf]
    %v130 = vld [vmem:[#allocation8 + $0x90] sm:$0xf]
    %v131 = vld [vmem:[#allocation8 + $0x94] sm:$0xf]
    %v132 = vld [vmem:[#allocation8 + $0x98] sm:$0xf]
    %v133 = vld [vmem:[#allocation8 + $0x9c] sm:$0xf]
    %v134 = vld [vmem:[#allocation8 + $0xa0] sm:$0xf]
    %v135 = vld [vmem:[#allocation8 + $0xa4] sm:$0xf]
    %v136 = vld [vmem:[#allocation8 + $0xa8] sm:$0xf]
    %v137 = vld [vmem:[#allocation8 + $0xac] sm:$0xf]
    %v138 = vld [vmem:[#allocation8 + $0xb0] sm:$0xf]
    %v139 = vld [vmem:[#allocation8 + $0xb4] sm:$0xf]
    %v140 = vld [vmem:[#allocation8 + $0xb8] sm:$0xf]
    %v141 = vld [vmem:[#allocation8 + $0xbc] sm:$0xf]
    %v142 = vld [vmem:[#allocation8 + $0xc0] sm:$0xf]
    %v143 = vld [vmem:[#allocation8 + $0xc4] sm:$0xf]
    %v144 = vld [vmem:[#allocation8 + $0xc8] sm:$0xf]
    %v145 = vld [vmem:[#allocation8 + $0xcc] sm:$0xf]
    %v146 = vld [vmem:[#allocation8 + $0xd0] sm:$0xf]
    %v147 = vld [vmem:[#allocation8 + $0xd4] sm:$0xf]
    %v148 = vld [vmem:[#allocation8 + $0xd8] sm:$0xf]
    %v149 = vld [vmem:[#allocation8 + $0xdc] sm:$0xf]
    %v150 = vld [vmem:[#allocation8 + $0xe0] sm:$0xf]
    %v151 = vld [vmem:[#allocation8 + $0xe4] sm:$0xf]
    %v152 = vld [vmem:[#allocation8 + $0xe8] sm:$0xf]
    %v153 = vld [vmem:[#allocation8 + $0xec] sm:$0xf]
    %v154 = vld [vmem:[#allocation8 + $0xf0] sm:$0xf]
    %v155 = vld [vmem:[#allocation8 + $0xf4] sm:$0xf]
    %v156 = vld [vmem:[#allocation8 + $0xf8] sm:$0xf]
    %v157 = vld [vmem:[#allocation8 + $0xfc] sm:$0xf]
    %v158 = vld [vmem:[#allocation8 + $0x100] sm:$0xf]
    %v159 = vld [vmem:[#allocation8 + $0x104] sm:$0xf]
    %v160 = vld [vmem:[#allocation8 + $0x108] sm:$0xf]
    %v161 = vld [vmem:[#allocation8 + $0x10c] sm:$0xf]
    %v162 = vld [vmem:[#allocation8 + $0x110] sm:$0xf]
    %v163 = vld [vmem:[#allocation8 + $0x114] sm:$0xf]
    %v164 = vld [vmem:[#allocation8 + $0x118] sm:$0xf]
    %v165 = vld [vmem:[#allocation8 + $0x11c] sm:$0xf]
    %v166 = vld [vmem:[#allocation8 + $0x120] sm:$0xf]
    %v167 = vld [vmem:[#allocation8 + $0x124] sm:$0xf]
    %v168 = vld [vmem:[#allocation8 + $0x128] sm:$0xf]
    %v169 = vld [vmem:[#allocation8 + $0x12c] sm:$0xf]
    %v170 = vld [vmem:[#allocation8 + $0x130] sm:$0xf]
    %v171 = vld [vmem:[#allocation8 + $0x134] sm:$0xf]
    %v172 = vld [vmem:[#allocation8 + $0x138] sm:$0xf]
    %v173 = vld [vmem:[#allocation8 + $0x13c] sm:$0xf]
    %v174 = vld [vmem:[#allocation8 + $0x140] sm:$0xf]
    %v175 = vld [vmem:[#allocation8 + $0x144] sm:$0xf]
    %v176 = vld [vmem:[#allocation8 + $0x148] sm:$0xf]
    %v177 = vld [vmem:[#allocation8 + $0x14c] sm:$0xf]
    %v178 = vld [vmem:[#allocation8 + $0x150] sm:$0xf]
    %v179 = vld [vmem:[#allocation8 + $0x154] sm:$0xf]
    %v180 = vld [vmem:[#allocation8 + $0x158] sm:$0xf]
    %v181 = vld [vmem:[#allocation8 + $0x15c] sm:$0xf]
    %v182 = vld [vmem:[#allocation8 + $0x160] sm:$0xf]
    %v183 = vld [vmem:[#allocation8 + $0x164] sm:$0xf]
    %v184 = vld [vmem:[#allocation8 + $0x168] sm:$0xf]
    %v185 = vld [vmem:[#allocation8 + $0x16c] sm:$0xf]
    %v186 = vld [vmem:[#allocation8 + $0x170] sm:$0xf]
    %v187 = vld [vmem:[#allocation8 + $0x174] sm:$0xf]
    %v188 = vld [vmem:[#allocation8 + $0x178] sm:$0xf]
    %v189 = vld [vmem:[#allocation8 + $0x17c] sm:$0xf]
    %v190 = vld [vmem:[#allocation8 + $0x180] sm:$0xf]
    %v191 = vld [vmem:[#allocation8 + $0x184] sm:$0xf]
    %v192 = vld [vmem:[#allocation8 + $0x188] sm:$0xf]
    %v193 = vld [vmem:[#allocation8 + $0x18c] sm:$0xf]
    %v194 = vld [vmem:[#allocation8 + $0x190] sm:$0xf]
    %v195 = vld [vmem:[#allocation8 + $0x194] sm:$0xf]
    %v196 = vld [vmem:[#allocation8 + $0x198] sm:$0xf]
    %v197 = vld [vmem:[#allocation8 + $0x19c] sm:$0xf]
    %v198 = vld [vmem:[#allocation8 + $0x1a0] sm:$0xf]
    %v199 = vld [vmem:[#allocation8 + $0x1a4] sm:$0xf]
    %v200 = vld [vmem:[#allocation8 + $0x1a8] sm:$0xf]
    %v201 = vld [vmem:[#allocation8 + $0x1ac] sm:$0xf]
    %v202 = vld [vmem:[#allocation8 + $0x1b0] sm:$0xf]
    %v203 = vld [vmem:[#allocation8 + $0x1b4] sm:$0xf]
    %v204 = vld [vmem:[#allocation8 + $0x1b8] sm:$0xf]
    %v205 = vld [vmem:[#allocation8 + $0x1bc] sm:$0xf]
    %v206 = vld [vmem:[#allocation8 + $0x1c0] sm:$0xf]
    %v207 = vld [vmem:[#allocation8 + $0x1c4] sm:$0xf]
    %v208 = vld [vmem:[#allocation8 + $0x1c8] sm:$0xf]
    %v209 = vld [vmem:[#allocation8 + $0x1cc] sm:$0xf]
    %v210 = vld [vmem:[#allocation8 + $0x1d0] sm:$0xf]
    %v211 = vld [vmem:[#allocation8 + $0x1d4] sm:$0xf]
    %v212 = vld [vmem:[#allocation8 + $0x1d8] sm:$0xf]
    %v213 = vld [vmem:[#allocation8 + $0x1dc] sm:$0xf]
    %v214 = vld [vmem:[#allocation8 + $0x1e0] sm:$0xf]
    %v215 = vld [vmem:[#allocation8 + $0x1e4] sm:$0xf]
    %v216 = vld [vmem:[#allocation8 + $0x1e8] sm:$0xf]
    %v217 = vld [vmem:[#allocation8 + $0x1ec] sm:$0xf]
    %v218 = vld [vmem:[#allocation8 + $0x1f0] sm:$0xf]
    %v219 = vld [vmem:[#allocation8 + $0x1f4] sm:$0xf]
    %v220 = vld [vmem:[#allocation8 + $0x1f8] sm:$0xf]
    %v221 = vld [vmem:[#allocation8 + $0x1fc] sm:$0xf]
    %v222 = vld [vmem:[%s4] sm:$0x1]
    %v223 = vld [vmem:[#allocation10] sm:$0xf]
    %v224 = vld [vmem:[#allocation10 + $0x4] sm:$0xf]
    %v225 = vld [vmem:[#allocation10 + $0x8] sm:$0xf]
    %v226 = vld [vmem:[#allocation10 + $0xc] sm:$0xf]
    %v227 = vld [vmem:[#allocation10 + $0x10] sm:$0xf]
    %v228 = vld [vmem:[#allocation10 + $0x14] sm:$0xf]
    %v229 = vld [vmem:[#allocation10 + $0x18] sm:$0xf]
    %v230 = vld [vmem:[#allocation10 + $0x1c] sm:$0xf]
    %v231 = vld [vmem:[#allocation10 + $0x20] sm:$0xf]
    %v232 = vld [vmem:[#allocation10 + $0x24] sm:$0xf]
    %v233 = vld [vmem:[#allocation10 + $0x28] sm:$0xf]
    %v234 = vld [vmem:[#allocation10 + $0x2c] sm:$0xf]
    %v235 = vld [vmem:[#allocation10 + $0x30] sm:$0xf]
    %v236 = vld [vmem:[#allocation10 + $0x34] sm:$0xf]
    %v237 = vld [vmem:[#allocation10 + $0x38] sm:$0xf]
    %v238 = vld [vmem:[#allocation10 + $0x3c] sm:$0xf]
    %v239 = vld [vmem:[%s6] sm:$0x1]
    %v240 = vld [vmem:[#allocation2] sm:$0xff]
    %v241 = vld [vmem:[#allocation2 + $0x8] sm:$0xff]
    %v244 = vcombine.high %v240, %v240
    %v246 = vunpack.c.l.s4 1983009808
    %v247 = vunpack.c.0.s8 %v246
    %v248 = vlaneseq
    %v249 = vshrl.u32 %v248, 7
    %v250 = vsub.s32 %v247, %v249
    %v251 = vrot.slane %v240, %v250
    %v253 = vunpack.c.l.s4 1983009808
    %v254 = vunpack.c.0.s8 %v253
    %v255 = vlaneseq
    %v256 = vshrl.u32 %v255, 7
    %v257 = vsub.s32 %v254, %v256
    %v258 = vrot.slane %v244, %v257
    %v259 = vcombine.high %v251, %v251
    %v260 = vcombine.high %v258, %v258
    %v261 = vcombine.high %v241, %v241
    %v263 = vunpack.c.l.s4 1983009808
    %v264 = vunpack.c.0.s8 %v263
    %v265 = vlaneseq
    %v266 = vshrl.u32 %v265, 7
    %v267 = vsub.s32 %v264, %v266
    %v268 = vrot.slane %v241, %v267
    %v270 = vunpack.c.l.s4 1983009808
    %v271 = vunpack.c.0.s8 %v270
    %v272 = vlaneseq
    %v273 = vshrl.u32 %v272, 7
    %v274 = vsub.s32 %v271, %v273
    %v275 = vrot.slane %v261, %v274
    %v276 = vcombine.high %v268, %v268
    %v277 = vcombine.high %v275, %v275
    %v286 = vpack.c.bf16 %v251, %v251
    %v287 = vpack.c.bf16 %v259, %v259
    %v288 = vpack.c.bf16 %v258, %v258
    %v289 = vpack.c.bf16 %v260, %v260
    %v290 = vpack.c.bf16 %v268, %v268
    %v291 = vpack.c.bf16 %v276, %v276
    %v292 = vpack.c.bf16 %v275, %v275
    %v293 = vpack.c.bf16 %v277, %v277
    %v295 = vlaneseq
    %v296 = vshrl.u32 %v295, 7
    %v297 = vsub.s32 0, %v296
    %v298 = vrot.slane %v222, %v297
    %v428 = vunpack.c.l.b16 %v94
    %v429 = vunpack.c.l.b16 %v95
    %v430 = vunpack.c.l.b16 %v96
    %v431 = vunpack.c.l.b16 %v97
    %v432 = vunpack.c.l.b16 %v98
    %v433 = vunpack.c.l.b16 %v99
    %v434 = vunpack.c.l.b16 %v100
    %v435 = vunpack.c.l.b16 %v101
    %v436 = vunpack.c.l.b16 %v102
    %v437 = vunpack.c.l.b16 %v103
    %v438 = vunpack.c.l.b16 %v104
    %v439 = vunpack.c.l.b16 %v105
    %v440 = vunpack.c.l.b16 %v106
    %v441 = vunpack.c.l.b16 %v107
    %v442 = vunpack.c.l.b16 %v108
    %v443 = vunpack.c.l.b16 %v109
    %v444 = vunpack.c.l.b16 %v110
    %v445 = vunpack.c.l.b16 %v111
    %v446 = vunpack.c.l.b16 %v112
    %v447 = vunpack.c.l.b16 %v113
    %v448 = vunpack.c.l.b16 %v114
    %v449 = vunpack.c.l.b16 %v115
    %v450 = vunpack.c.l.b16 %v116
    %v451 = vunpack.c.l.b16 %v117
    %v452 = vunpack.c.l.b16 %v118
    %v453 = vunpack.c.l.b16 %v119
    %v454 = vunpack.c.l.b16 %v120
    %v455 = vunpack.c.l.b16 %v121
    %v456 = vunpack.c.l.b16 %v122
    %v457 = vunpack.c.l.b16 %v123
    %v458 = vunpack.c.l.b16 %v124
    %v459 = vunpack.c.l.b16 %v125
    %v460 = vunpack.c.l.b16 %v126
    %v461 = vunpack.c.l.b16 %v127
    %v462 = vunpack.c.l.b16 %v128
    %v463 = vunpack.c.l.b16 %v129
    %v464 = vunpack.c.l.b16 %v130
    %v465 = vunpack.c.l.b16 %v131
    %v466 = vunpack.c.l.b16 %v132
    %v467 = vunpack.c.l.b16 %v133
    %v468 = vunpack.c.l.b16 %v134
    %v469 = vunpack.c.l.b16 %v135
    %v470 = vunpack.c.l.b16 %v136
    %v471 = vunpack.c.l.b16 %v137
    %v472 = vunpack.c.l.b16 %v138
    %v473 = vunpack.c.l.b16 %v139
    %v474 = vunpack.c.l.b16 %v140
    %v475 = vunpack.c.l.b16 %v141
    %v476 = vunpack.c.l.b16 %v142
    %v477 = vunpack.c.l.b16 %v143
    %v478 = vunpack.c.l.b16 %v144
    %v479 = vunpack.c.l.b16 %v145
    %v480 = vunpack.c.l.b16 %v146
    %v481 = vunpack.c.l.b16 %v147
    %v482 = vunpack.c.l.b16 %v148
    %v483 = vunpack.c.l.b16 %v149
    %v484 = vunpack.c.l.b16 %v150
    %v485 = vunpack.c.l.b16 %v151
    %v486 = vunpack.c.l.b16 %v152
    %v487 = vunpack.c.l.b16 %v153
    %v488 = vunpack.c.l.b16 %v154
    %v489 = vunpack.c.l.b16 %v155
    %v490 = vunpack.c.l.b16 %v156
    %v491 = vunpack.c.l.b16 %v157
    %v492 = vunpack.c.l.b16 %v158
    %v493 = vunpack.c.l.b16 %v159
    %v494 = vunpack.c.l.b16 %v160
    %v495 = vunpack.c.l.b16 %v161
    %v496 = vunpack.c.l.b16 %v162
    %v497 = vunpack.c.l.b16 %v163
    %v498 = vunpack.c.l.b16 %v164
    %v499 = vunpack.c.l.b16 %v165
    %v500 = vunpack.c.l.b16 %v166
    %v501 = vunpack.c.l.b16 %v167
    %v502 = vunpack.c.l.b16 %v168
    %v503 = vunpack.c.l.b16 %v169
    %v504 = vunpack.c.l.b16 %v170
    %v505 = vunpack.c.l.b16 %v171
    %v506 = vunpack.c.l.b16 %v172
    %v507 = vunpack.c.l.b16 %v173
    %v508 = vunpack.c.l.b16 %v174
    %v509 = vunpack.c.l.b16 %v175
    %v510 = vunpack.c.l.b16 %v176
    %v511 = vunpack.c.l.b16 %v177
    %v512 = vunpack.c.l.b16 %v178
    %v513 = vunpack.c.l.b16 %v179
    %v514 = vunpack.c.l.b16 %v180
    %v515 = vunpack.c.l.b16 %v181
    %v516 = vunpack.c.l.b16 %v182
    %v517 = vunpack.c.l.b16 %v183
    %v518 = vunpack.c.l.b16 %v184
    %v519 = vunpack.c.l.b16 %v185
    %v520 = vunpack.c.l.b16 %v186
    %v521 = vunpack.c.l.b16 %v187
    %v522 = vunpack.c.l.b16 %v188
    %v523 = vunpack.c.l.b16 %v189
    %v524 = vunpack.c.l.b16 %v190
    %v525 = vunpack.c.l.b16 %v191
    %v526 = vunpack.c.l.b16 %v192
    %v527 = vunpack.c.l.b16 %v193
    %v528 = vunpack.c.l.b16 %v194
    %v529 = vunpack.c.l.b16 %v195
    %v530 = vunpack.c.l.b16 %v196
    %v531 = vunpack.c.l.b16 %v197
    %v532 = vunpack.c.l.b16 %v198
    %v533 = vunpack.c.l.b16 %v199
    %v534 = vunpack.c.l.b16 %v200
    %v535 = vunpack.c.l.b16 %v201
    %v536 = vunpack.c.l.b16 %v202
    %v537 = vunpack.c.l.b16 %v203
    %v538 = vunpack.c.l.b16 %v204
    %v539 = vunpack.c.l.b16 %v205
    %v540 = vunpack.c.l.b16 %v206
    %v541 = vunpack.c.l.b16 %v207
    %v542 = vunpack.c.l.b16 %v208
    %v543 = vunpack.c.l.b16 %v209
    %v544 = vunpack.c.l.b16 %v210
    %v545 = vunpack.c.l.b16 %v211
    %v546 = vunpack.c.l.b16 %v212
    %v547 = vunpack.c.l.b16 %v213
    %v548 = vunpack.c.l.b16 %v214
    %v549 = vunpack.c.l.b16 %v215
    %v550 = vunpack.c.l.b16 %v216
    %v551 = vunpack.c.l.b16 %v217
    %v552 = vunpack.c.l.b16 %v218
    %v553 = vunpack.c.l.b16 %v219
    %v554 = vunpack.c.l.b16 %v220
    %v555 = vunpack.c.l.b16 %v221
    %v556 = vpack.c.b16 %v429, %v428
    %v557 = vpack.c.b16 %v431, %v430
    %v558 = vpack.c.b16 %v433, %v432
    %v559 = vpack.c.b16 %v435, %v434
    %v560 = vpack.c.b16 %v437, %v436
    %v561 = vpack.c.b16 %v439, %v438
    %v562 = vpack.c.b16 %v441, %v440
    %v563 = vpack.c.b16 %v443, %v442
    %v564 = vpack.c.b16 %v445, %v444
    %v565 = vpack.c.b16 %v447, %v446
    %v566 = vpack.c.b16 %v449, %v448
    %v567 = vpack.c.b16 %v451, %v450
    %v568 = vpack.c.b16 %v453, %v452
    %v569 = vpack.c.b16 %v455, %v454
    %v570 = vpack.c.b16 %v457, %v456
    %v571 = vpack.c.b16 %v459, %v458
    %v572 = vpack.c.b16 %v461, %v460
    %v573 = vpack.c.b16 %v463, %v462
    %v574 = vpack.c.b16 %v465, %v464
    %v575 = vpack.c.b16 %v467, %v466
    %v576 = vpack.c.b16 %v469, %v468
    %v577 = vpack.c.b16 %v471, %v470
    %v578 = vpack.c.b16 %v473, %v472
    %v579 = vpack.c.b16 %v475, %v474
    %v580 = vpack.c.b16 %v477, %v476
    %v581 = vpack.c.b16 %v479, %v478
    %v582 = vpack.c.b16 %v481, %v480
    %v583 = vpack.c.b16 %v483, %v482
    %v584 = vpack.c.b16 %v485, %v484
    %v585 = vpack.c.b16 %v487, %v486
    %v586 = vpack.c.b16 %v489, %v488
    %v587 = vpack.c.b16 %v491, %v490
    %v588 = vpack.c.b16 %v493, %v492
    %v589 = vpack.c.b16 %v495, %v494
    %v590 = vpack.c.b16 %v497, %v496
    %v591 = vpack.c.b16 %v499, %v498
    %v592 = vpack.c.b16 %v501, %v500
    %v593 = vpack.c.b16 %v503, %v502
    %v594 = vpack.c.b16 %v505, %v504
    %v595 = vpack.c.b16 %v507, %v506
    %v596 = vpack.c.b16 %v509, %v508
    %v597 = vpack.c.b16 %v511, %v510
    %v598 = vpack.c.b16 %v513, %v512
    %v599 = vpack.c.b16 %v515, %v514
    %v600 = vpack.c.b16 %v517, %v516
    %v601 = vpack.c.b16 %v519, %v518
    %v602 = vpack.c.b16 %v521, %v520
    %v603 = vpack.c.b16 %v523, %v522
    %v604 = vpack.c.b16 %v525, %v524
    %v605 = vpack.c.b16 %v527, %v526
    %v606 = vpack.c.b16 %v529, %v528
    %v607 = vpack.c.b16 %v531, %v530
    %v608 = vpack.c.b16 %v533, %v532
    %v609 = vpack.c.b16 %v535, %v534
    %v610 = vpack.c.b16 %v537, %v536
    %v611 = vpack.c.b16 %v539, %v538
    %v612 = vpack.c.b16 %v541, %v540
    %v613 = vpack.c.b16 %v543, %v542
    %v614 = vpack.c.b16 %v545, %v544
    %v615 = vpack.c.b16 %v547, %v546
    %v616 = vpack.c.b16 %v549, %v548
    %v617 = vpack.c.b16 %v551, %v550
    %v618 = vpack.c.b16 %v553, %v552
    %v619 = vpack.c.b16 %v555, %v554
    %684 = vmatprep.subr.bf16.mxu0 0
    %685 = vmatpush1.bf16.msra.mxu0 %v563
    %686 = vmatprep.subr.bf16.mxu0 0
    %687 = vmatpush1.bf16.msra.mxu0 %v562
    %688 = vmatprep.subr.bf16.mxu0 0
    %689 = vmatpush1.bf16.msra.mxu0 %v561
    %690 = vmatprep.subr.bf16.mxu0 0
    %691 = vmatpush1.bf16.msra.mxu0 %v560
    %692 = vmatprep.subr.bf16.mxu0 0
    %693 = vmatpush1.bf16.msra.mxu0 %v559
    %694 = vmatprep.subr.bf16.mxu0 0
    %695 = vmatpush1.bf16.msra.mxu0 %v558
    %696 = vmatprep.subr.bf16.mxu0 0
    %697 = vmatpush1.bf16.msra.mxu0 %v557
    %698 = vmatprep.subr.bf16.mxu0 0
    %699 = vmatpush1.bf16.msra.mxu0 %v556
    %700 = vmatprep.subr.bf16.mxu0 0
    %701 = vmatpush2.bf16.msra.mxu0 %v571
    %702 = vmatprep.subr.bf16.mxu0 0
    %703 = vmatpush2.bf16.msra.mxu0 %v570
    %704 = vmatprep.subr.bf16.mxu0 0
    %705 = vmatpush2.bf16.msra.mxu0 %v569
    %706 = vmatprep.subr.bf16.mxu0 0
    %707 = vmatpush2.bf16.msra.mxu0 %v568
    %708 = vmatprep.subr.bf16.mxu0 0
    %709 = vmatpush2.bf16.msra.mxu0 %v567
    %710 = vmatprep.subr.bf16.mxu0 0
    %711 = vmatpush2.bf16.msra.mxu0 %v566
    %712 = vmatprep.subr.bf16.mxu0 0
    %713 = vmatpush2.bf16.msra.mxu0 %v565
    %714 = vmatprep.subr.bf16.mxu0 0
    %715 = vmatpush2.bf16.msra.mxu0 %v564
    %716 = vmatprep.mubr.bf16.mxu0 %v287
    %717 = vmatmul.mubr.bf16.gmra.mxu0 %v286
    %v718 = vpop.f32.mrf.mxu0
    %v719 = vadd.f32 %v298, %v718
    %v720 = vpop.f32.mrf.mxu0
    %v721 = vpop.f32.mrf.mxu0
    %v722 = vpop.f32.mrf.mxu0
    %723 = vdwg.mxu0
    %724 = vmatprep.subr.bf16.mxu0 0
    %725 = vmatpush1.bf16.msra.mxu0 %v579
    %726 = vmatprep.subr.bf16.mxu0 0
    %727 = vmatpush1.bf16.msra.mxu0 %v578
    %728 = vmatprep.subr.bf16.mxu0 0
    %729 = vmatpush1.bf16.msra.mxu0 %v577
    %730 = vmatprep.subr.bf16.mxu0 0
    %731 = vmatpush1.bf16.msra.mxu0 %v576
    %732 = vmatprep.subr.bf16.mxu0 0
    %733 = vmatpush1.bf16.msra.mxu0 %v575
    %734 = vmatprep.subr.bf16.mxu0 0
    %735 = vmatpush1.bf16.msra.mxu0 %v574
    %736 = vmatprep.subr.bf16.mxu0 0
    %737 = vmatpush1.bf16.msra.mxu0 %v573
    %738 = vmatprep.subr.bf16.mxu0 0
    %739 = vmatpush1.bf16.msra.mxu0 %v572
    %740 = vmatprep.subr.bf16.mxu0 0
    %741 = vmatpush2.bf16.msra.mxu0 %v587
    %742 = vmatprep.subr.bf16.mxu0 0
    %743 = vmatpush2.bf16.msra.mxu0 %v586
    %744 = vmatprep.subr.bf16.mxu0 0
    %745 = vmatpush2.bf16.msra.mxu0 %v585
    %746 = vmatprep.subr.bf16.mxu0 0
    %747 = vmatpush2.bf16.msra.mxu0 %v584
    %748 = vmatprep.subr.bf16.mxu0 0
    %749 = vmatpush2.bf16.msra.mxu0 %v583
    %750 = vmatprep.subr.bf16.mxu0 0
    %751 = vmatpush2.bf16.msra.mxu0 %v582
    %752 = vmatprep.subr.bf16.mxu0 0
    %753 = vmatpush2.bf16.msra.mxu0 %v581
    %754 = vmatprep.subr.bf16.mxu0 0
    %755 = vmatpush2.bf16.msra.mxu0 %v580
    %756 = vmatprep.mubr.bf16.mxu0 %v289
    %757 = vmatmul.mubr.bf16.gmra.mxu0 %v288
    %v758 = vpop.f32.mrf.mxu0
    %v759 = vadd.f32 %v719, %v758
    %v760 = vpop.f32.mrf.mxu0
    %v761 = vpop.f32.mrf.mxu0
    %v762 = vpop.f32.mrf.mxu0
    %763 = vdwg.mxu0
    %764 = vmatprep.subr.bf16.mxu0 0
    %765 = vmatpush1.bf16.msra.mxu0 %v595
    %766 = vmatprep.subr.bf16.mxu0 0
    %767 = vmatpush1.bf16.msra.mxu0 %v594
    %768 = vmatprep.subr.bf16.mxu0 0
    %769 = vmatpush1.bf16.msra.mxu0 %v593
    %770 = vmatprep.subr.bf16.mxu0 0
    %771 = vmatpush1.bf16.msra.mxu0 %v592
    %772 = vmatprep.subr.bf16.mxu0 0
    %773 = vmatpush1.bf16.msra.mxu0 %v591
    %774 = vmatprep.subr.bf16.mxu0 0
    %775 = vmatpush1.bf16.msra.mxu0 %v590
    %776 = vmatprep.subr.bf16.mxu0 0
    %777 = vmatpush1.bf16.msra.mxu0 %v589
    %778 = vmatprep.subr.bf16.mxu0 0
    %779 = vmatpush1.bf16.msra.mxu0 %v588
    %780 = vmatprep.subr.bf16.mxu0 0
    %781 = vmatpush2.bf16.msra.mxu0 %v603
    %782 = vmatprep.subr.bf16.mxu0 0
    %783 = vmatpush2.bf16.msra.mxu0 %v602
    %784 = vmatprep.subr.bf16.mxu0 0
    %785 = vmatpush2.bf16.msra.mxu0 %v601
    %786 = vmatprep.subr.bf16.mxu0 0
    %787 = vmatpush2.bf16.msra.mxu0 %v600
    %788 = vmatprep.subr.bf16.mxu0 0
    %789 = vmatpush2.bf16.msra.mxu0 %v599
    %790 = vmatprep.subr.bf16.mxu0 0
    %791 = vmatpush2.bf16.msra.mxu0 %v598
    %792 = vmatprep.subr.bf16.mxu0 0
    %793 = vmatpush2.bf16.msra.mxu0 %v597
    %794 = vmatprep.subr.bf16.mxu0 0
    %795 = vmatpush2.bf16.msra.mxu0 %v596
    %796 = vmatprep.mubr.bf16.mxu0 %v291
    %797 = vmatmul.mubr.bf16.gmra.mxu0 %v290
    %v798 = vpop.f32.mrf.mxu0
    %v799 = vadd.f32 %v759, %v798
    %v800 = vpop.f32.mrf.mxu0
    %v801 = vpop.f32.mrf.mxu0
    %v802 = vpop.f32.mrf.mxu0
    %803 = vdwg.mxu0
    %804 = vmatprep.subr.bf16.mxu0 0
    %805 = vmatpush1.bf16.msra.mxu0 %v611
    %806 = vmatprep.subr.bf16.mxu0 0
    %807 = vmatpush1.bf16.msra.mxu0 %v610
    %808 = vmatprep.subr.bf16.mxu0 0
    %809 = vmatpush1.bf16.msra.mxu0 %v609
    %810 = vmatprep.subr.bf16.mxu0 0
    %811 = vmatpush1.bf16.msra.mxu0 %v608
    %812 = vmatprep.subr.bf16.mxu0 0
    %813 = vmatpush1.bf16.msra.mxu0 %v607
    %814 = vmatprep.subr.bf16.mxu0 0
    %815 = vmatpush1.bf16.msra.mxu0 %v606
    %816 = vmatprep.subr.bf16.mxu0 0
    %817 = vmatpush1.bf16.msra.mxu0 %v605
    %818 = vmatprep.subr.bf16.mxu0 0
    %819 = vmatpush1.bf16.msra.mxu0 %v604
    %820 = vmatprep.subr.bf16.mxu0 0
    %821 = vmatpush2.bf16.msra.mxu0 %v619
    %822 = vmatprep.subr.bf16.mxu0 0
    %823 = vmatpush2.bf16.msra.mxu0 %v618
    %824 = vmatprep.subr.bf16.mxu0 0
    %825 = vmatpush2.bf16.msra.mxu0 %v617
    %826 = vmatprep.subr.bf16.mxu0 0
    %827 = vmatpush2.bf16.msra.mxu0 %v616
    %828 = vmatprep.subr.bf16.mxu0 0
    %829 = vmatpush2.bf16.msra.mxu0 %v615
    %830 = vmatprep.subr.bf16.mxu0 0
    %831 = vmatpush2.bf16.msra.mxu0 %v614
    %832 = vmatprep.subr.bf16.mxu0 0
    %833 = vmatpush2.bf16.msra.mxu0 %v613
    %834 = vmatprep.subr.bf16.mxu0 0
    %835 = vmatpush2.bf16.msra.mxu0 %v612
    %836 = vmatprep.mubr.bf16.mxu0 %v293
    %837 = vmatmul.mubr.bf16.gmra.mxu0 %v292
    %v838 = vpop.f32.mrf.mxu0
    %v839 = vadd.f32 %v799, %v838
    %v840 = vpop.f32.mrf.mxu0
    %v841 = vpop.f32.mrf.mxu0
    %v842 = vpop.f32.mrf.mxu0
    %843 = vdwg.mxu0
    %v844 = vmax.f32 %v839, 0.0
    %v845 = vpack.c.bf16 %v844, %v844
    %v847 = vlaneseq
    %v848 = vshrl.u32 %v847, 7
    %v849 = vsub.s32 0, %v848
    %v850 = vrot.slane %v239, %v849
    %v868 = vunpack.c.l.b16 %v223
    %v869 = vunpack.c.l.b16 %v224
    %v870 = vunpack.c.l.b16 %v225
    %v871 = vunpack.c.l.b16 %v226
    %v872 = vunpack.c.l.b16 %v227
    %v873 = vunpack.c.l.b16 %v228
    %v874 = vunpack.c.l.b16 %v229
    %v875 = vunpack.c.l.b16 %v230
    %v876 = vunpack.c.l.b16 %v231
    %v877 = vunpack.c.l.b16 %v232
    %v878 = vunpack.c.l.b16 %v233
    %v879 = vunpack.c.l.b16 %v234
    %v880 = vunpack.c.l.b16 %v235
    %v881 = vunpack.c.l.b16 %v236
    %v882 = vunpack.c.l.b16 %v237
    %v883 = vunpack.c.l.b16 %v238
    %v884 = vpack.c.b16 %v869, %v868
    %v885 = vpack.c.b16 %v871, %v870
    %v886 = vpack.c.b16 %v873, %v872
    %v887 = vpack.c.b16 %v875, %v874
    %v888 = vpack.c.b16 %v877, %v876
    %v889 = vpack.c.b16 %v879, %v878
    %v890 = vpack.c.b16 %v881, %v880
    %v891 = vpack.c.b16 %v883, %v882
    %900 = vmatprep.subr.bf16.mxu0 0
    %901 = vmatpush1.bf16.msra.mxu0 %v891
    %902 = vmatprep.subr.bf16.mxu0 0
    %903 = vmatpush1.bf16.msra.mxu0 %v890
    %904 = vmatprep.subr.bf16.mxu0 0
    %905 = vmatpush1.bf16.msra.mxu0 %v889
    %906 = vmatprep.subr.bf16.mxu0 0
    %907 = vmatpush1.bf16.msra.mxu0 %v888
    %908 = vmatprep.subr.bf16.mxu0 0
    %909 = vmatpush1.bf16.msra.mxu0 %v887
    %910 = vmatprep.subr.bf16.mxu0 0
    %911 = vmatpush1.bf16.msra.mxu0 %v886
    %912 = vmatprep.subr.bf16.mxu0 0
    %913 = vmatpush1.bf16.msra.mxu0 %v885
    %914 = vmatprep.subr.bf16.mxu0 0
    %915 = vmatpush1.bf16.msra.mxu0 %v884
    %916 = vmatprep.subr.bf16.mxu0 0
    %917 = vmatpush2.bf16.msra.mxu0 0
    %918 = vmatprep.subr.bf16.mxu0 0
    %919 = vmatpush2.bf16.msra.mxu0 0
    %920 = vmatprep.subr.bf16.mxu0 0
    %921 = vmatpush2.bf16.msra.mxu0 0
    %922 = vmatprep.subr.bf16.mxu0 0
    %923 = vmatpush2.bf16.msra.mxu0 0
    %924 = vmatprep.subr.bf16.mxu0 0
    %925 = vmatpush2.bf16.msra.mxu0 0
    %926 = vmatprep.subr.bf16.mxu0 0
    %927 = vmatpush2.bf16.msra.mxu0 0
    %928 = vmatprep.subr.bf16.mxu0 0
    %929 = vmatpush2.bf16.msra.mxu0 0
    %930 = vmatprep.subr.bf16.mxu0 0
    %931 = vmatpush2.bf16.msra.mxu0 0
    %932 = vmatprep.mubr.bf16.mxu0 0
    %933 = vmatmul.mubr.bf16.gmra.mxu0 %v845
    %v934 = vpop.f32.mrf.mxu0
    %v935 = vadd.f32 %v850, %v934
    %v936 = vpop.f32.mrf.mxu0
    %v937 = vpop.f32.mrf.mxu0
    %v938 = vpop.f32.mrf.mxu0
    %939 = vdwg.mxu0
    %940 = vst [vmem:[#allocation11] sm:$0x3] %v935
    %v941 = vld [vmem:[#allocation5] sm:$0xff]
    %v942 = vld [vmem:[#allocation5 + $0x8] sm:$0xff]
    %v945 = vcombine.high %v941, %v941
    %v947 = vunpack.c.l.s4 1983009808
    %v948 = vunpack.c.0.s8 %v947
    %v949 = vlaneseq
    %v950 = vshrl.u32 %v949, 7
    %v951 = vsub.s32 %v948, %v950
    %v952 = vrot.slane %v941, %v951
    %v954 = vunpack.c.l.s4 1983009808
    %v955 = vunpack.c.0.s8 %v954
    %v956 = vlaneseq
    %v957 = vshrl.u32 %v956, 7
    %v958 = vsub.s32 %v955, %v957
    %v959 = vrot.slane %v945, %v958
    %v960 = vcombine.high %v952, %v952
    %v961 = vcombine.high %v959, %v959
    %v962 = vcombine.high %v942, %v942
    %v964 = vunpack.c.l.s4 1983009808
    %v965 = vunpack.c.0.s8 %v964
    %v966 = vlaneseq
    %v967 = vshrl.u32 %v966, 7
    %v968 = vsub.s32 %v965, %v967
    %v969 = vrot.slane %v942, %v968
    %v971 = vunpack.c.l.s4 1983009808
    %v972 = vunpack.c.0.s8 %v971
    %v973 = vlaneseq
    %v974 = vshrl.u32 %v973, 7
    %v975 = vsub.s32 %v972, %v974
    %v976 = vrot.slane %v962, %v975
    %v977 = vcombine.high %v969, %v969
    %v978 = vcombine.high %v976, %v976
    %v987 = vpack.c.bf16 %v952, %v952
    %v988 = vpack.c.bf16 %v960, %v960
    %v989 = vpack.c.bf16 %v959, %v959
    %v990 = vpack.c.bf16 %v961, %v961
    %v991 = vpack.c.bf16 %v969, %v969
    %v992 = vpack.c.bf16 %v977, %v977
    %v993 = vpack.c.bf16 %v976, %v976
    %v994 = vpack.c.bf16 %v978, %v978
    %995 = vmatprep.subr.bf16.mxu0 0
    %996 = vmatpush1.bf16.msra.mxu0 %v563
    %997 = vmatprep.subr.bf16.mxu0 0
    %998 = vmatpush1.bf16.msra.mxu0 %v562
    %999 = vmatprep.subr.bf16.mxu0 0
    %1000 = vmatpush1.bf16.msra.mxu0 %v561
    %1001 = vmatprep.subr.bf16.mxu0 0
    %1002 = vmatpush1.bf16.msra.mxu0 %v560
    %1003 = vmatprep.subr.bf16.mxu0 0
    %1004 = vmatpush1.bf16.msra.mxu0 %v559
    %1005 = vmatprep.subr.bf16.mxu0 0
    %1006 = vmatpush1.bf16.msra.mxu0 %v558
    %1007 = vmatprep.subr.bf16.mxu0 0
    %1008 = vmatpush1.bf16.msra.mxu0 %v557
    %1009 = vmatprep.subr.bf16.mxu0 0
    %1010 = vmatpush1.bf16.msra.mxu0 %v556
    %1011 = vmatprep.subr.bf16.mxu0 0
    %1012 = vmatpush2.bf16.msra.mxu0 %v571
    %1013 = vmatprep.subr.bf16.mxu0 0
    %1014 = vmatpush2.bf16.msra.mxu0 %v570
    %1015 = vmatprep.subr.bf16.mxu0 0
    %1016 = vmatpush2.bf16.msra.mxu0 %v569
    %1017 = vmatprep.subr.bf16.mxu0 0
    %1018 = vmatpush2.bf16.msra.mxu0 %v568
    %1019 = vmatprep.subr.bf16.mxu0 0
    %1020 = vmatpush2.bf16.msra.mxu0 %v567
    %1021 = vmatprep.subr.bf16.mxu0 0
    %1022 = vmatpush2.bf16.msra.mxu0 %v566
    %1023 = vmatprep.subr.bf16.mxu0 0
    %1024 = vmatpush2.bf16.msra.mxu0 %v565
    %1025 = vmatprep.subr.bf16.mxu0 0
    %1026 = vmatpush2.bf16.msra.mxu0 %v564
    %1027 = vmatprep.mubr.bf16.mxu0 %v988
    %1028 = vmatmul.mubr.bf16.gmra.mxu0 %v987
    %v1029 = vpop.f32.mrf.mxu0
    %v1030 = vadd.f32 %v298, %v1029
    %v1031 = vpop.f32.mrf.mxu0
    %v1032 = vpop.f32.mrf.mxu0
    %v1033 = vpop.f32.mrf.mxu0
    %1034 = vdwg.mxu0
    %1035 = vmatprep.subr.bf16.mxu0 0
    %1036 = vmatpush1.bf16.msra.mxu0 %v579
    %1037 = vmatprep.subr.bf16.mxu0 0
    %1038 = vmatpush1.bf16.msra.mxu0 %v578
    %1039 = vmatprep.subr.bf16.mxu0 0
    %1040 = vmatpush1.bf16.msra.mxu0 %v577
    %1041 = vmatprep.subr.bf16.mxu0 0
    %1042 = vmatpush1.bf16.msra.mxu0 %v576
    %1043 = vmatprep.subr.bf16.mxu0 0
    %1044 = vmatpush1.bf16.msra.mxu0 %v575
    %1045 = vmatprep.subr.bf16.mxu0 0
    %1046 = vmatpush1.bf16.msra.mxu0 %v574
    %1047 = vmatprep.subr.bf16.mxu0 0
    %1048 = vmatpush1.bf16.msra.mxu0 %v573
    %1049 = vmatprep.subr.bf16.mxu0 0
    %1050 = vmatpush1.bf16.msra.mxu0 %v572
    %1051 = vmatprep.subr.bf16.mxu0 0
    %1052 = vmatpush2.bf16.msra.mxu0 %v587
    %1053 = vmatprep.subr.bf16.mxu0 0
    %1054 = vmatpush2.bf16.msra.mxu0 %v586
    %1055 = vmatprep.subr.bf16.mxu0 0
    %1056 = vmatpush2.bf16.msra.mxu0 %v585
    %1057 = vmatprep.subr.bf16.mxu0 0
    %1058 = vmatpush2.bf16.msra.mxu0 %v584
    %1059 = vmatprep.subr.bf16.mxu0 0
    %1060 = vmatpush2.bf16.msra.mxu0 %v583
    %1061 = vmatprep.subr.bf16.mxu0 0
    %1062 = vmatpush2.bf16.msra.mxu0 %v582
    %1063 = vmatprep.subr.bf16.mxu0 0
    %1064 = vmatpush2.bf16.msra.mxu0 %v581
    %1065 = vmatprep.subr.bf16.mxu0 0
    %1066 = vmatpush2.bf16.msra.mxu0 %v580
    %1067 = vmatprep.mubr.bf16.mxu0 %v990
    %1068 = vmatmul.mubr.bf16.gmra.mxu0 %v989
    %v1069 = vpop.f32.mrf.mxu0
    %v1070 = vadd.f32 %v1030, %v1069
    %v1071 = vpop.f32.mrf.mxu0
    %v1072 = vpop.f32.mrf.mxu0
    %v1073 = vpop.f32.mrf.mxu0
    %1074 = vdwg.mxu0
    %1075 = vmatprep.subr.bf16.mxu0 0
    %1076 = vmatpush1.bf16.msra.mxu0 %v595
    %1077 = vmatprep.subr.bf16.mxu0 0
    %1078 = vmatpush1.bf16.msra.mxu0 %v594
    %1079 = vmatprep.subr.bf16.mxu0 0
    %1080 = vmatpush1.bf16.msra.mxu0 %v593
    %1081 = vmatprep.subr.bf16.mxu0 0
    %1082 = vmatpush1.bf16.msra.mxu0 %v592
    %1083 = vmatprep.subr.bf16.mxu0 0
    %1084 = vmatpush1.bf16.msra.mxu0 %v591
    %1085 = vmatprep.subr.bf16.mxu0 0
    %1086 = vmatpush1.bf16.msra.mxu0 %v590
    %1087 = vmatprep.subr.bf16.mxu0 0
    %1088 = vmatpush1.bf16.msra.mxu0 %v589
    %1089 = vmatprep.subr.bf16.mxu0 0
    %1090 = vmatpush1.bf16.msra.mxu0 %v588
    %1091 = vmatprep.subr.bf16.mxu0 0
    %1092 = vmatpush2.bf16.msra.mxu0 %v603
    %1093 = vmatprep.subr.bf16.mxu0 0
    %1094 = vmatpush2.bf16.msra.mxu0 %v602
    %1095 = vmatprep.subr.bf16.mxu0 0
    %1096 = vmatpush2.bf16.msra.mxu0 %v601
    %1097 = vmatprep.subr.bf16.mxu0 0
    %1098 = vmatpush2.bf16.msra.mxu0 %v600
    %1099 = vmatprep.subr.bf16.mxu0 0
    %1100 = vmatpush2.bf16.msra.mxu0 %v599
    %1101 = vmatprep.subr.bf16.mxu0 0
    %1102 = vmatpush2.bf16.msra.mxu0 %v598
    %1103 = vmatprep.subr.bf16.mxu0 0
    %1104 = vmatpush2.bf16.msra.mxu0 %v597
    %1105 = vmatprep.subr.bf16.mxu0 0
    %1106 = vmatpush2.bf16.msra.mxu0 %v596
    %1107 = vmatprep.mubr.bf16.mxu0 %v992
    %1108 = vmatmul.mubr.bf16.gmra.mxu0 %v991
    %v1109 = vpop.f32.mrf.mxu0
    %v1110 = vadd.f32 %v1070, %v1109
    %v1111 = vpop.f32.mrf.mxu0
    %v1112 = vpop.f32.mrf.mxu0
    %v1113 = vpop.f32.mrf.mxu0
    %1114 = vdwg.mxu0
    %1115 = vmatprep.subr.bf16.mxu0 0
    %1116 = vmatpush1.bf16.msra.mxu0 %v611
    %1117 = vmatprep.subr.bf16.mxu0 0
    %1118 = vmatpush1.bf16.msra.mxu0 %v610
    %1119 = vmatprep.subr.bf16.mxu0 0
    %1120 = vmatpush1.bf16.msra.mxu0 %v609
    %1121 = vmatprep.subr.bf16.mxu0 0
    %1122 = vmatpush1.bf16.msra.mxu0 %v608
    %1123 = vmatprep.subr.bf16.mxu0 0
    %1124 = vmatpush1.bf16.msra.mxu0 %v607
    %1125 = vmatprep.subr.bf16.mxu0 0
    %1126 = vmatpush1.bf16.msra.mxu0 %v606
    %1127 = vmatprep.subr.bf16.mxu0 0
    %1128 = vmatpush1.bf16.msra.mxu0 %v605
    %1129 = vmatprep.subr.bf16.mxu0 0
    %1130 = vmatpush1.bf16.msra.mxu0 %v604
    %1131 = vmatprep.subr.bf16.mxu0 0
    %1132 = vmatpush2.bf16.msra.mxu0 %v619
    %1133 = vmatprep.subr.bf16.mxu0 0
    %1134 = vmatpush2.bf16.msra.mxu0 %v618
    %1135 = vmatprep.subr.bf16.mxu0 0
    %1136 = vmatpush2.bf16.msra.mxu0 %v617
    %1137 = vmatprep.subr.bf16.mxu0 0
    %1138 = vmatpush2.bf16.msra.mxu0 %v616
    %1139 = vmatprep.subr.bf16.mxu0 0
    %1140 = vmatpush2.bf16.msra.mxu0 %v615
    %1141 = vmatprep.subr.bf16.mxu0 0
    %1142 = vmatpush2.bf16.msra.mxu0 %v614
    %1143 = vmatprep.subr.bf16.mxu0 0
    %1144 = vmatpush2.bf16.msra.mxu0 %v613
    %1145 = vmatprep.subr.bf16.mxu0 0
    %1146 = vmatpush2.bf16.msra.mxu0 %v612
    %1147 = vmatprep.mubr.bf16.mxu0 %v994
    %1148 = vmatmul.mubr.bf16.gmra.mxu0 %v993
    %v1149 = vpop.f32.mrf.mxu0
    %v1150 = vadd.f32 %v1110, %v1149
    %v1151 = vpop.f32.mrf.mxu0
    %v1152 = vpop.f32.mrf.mxu0
    %v1153 = vpop.f32.mrf.mxu0
    %1154 = vdwg.mxu0
    %v1155 = vmax.f32 %v1150, 0.0
    %v1156 = vpack.c.bf16 %v1155, %v1155
    %1157 = vmatprep.subr.bf16.mxu0 0
    %1158 = vmatpush1.bf16.msra.mxu0 %v891
    %1159 = vmatprep.subr.bf16.mxu0 0
    %1160 = vmatpush1.bf16.msra.mxu0 %v890
    %1161 = vmatprep.subr.bf16.mxu0 0
    %1162 = vmatpush1.bf16.msra.mxu0 %v889
    %1163 = vmatprep.subr.bf16.mxu0 0
    %1164 = vmatpush1.bf16.msra.mxu0 %v888
    %1165 = vmatprep.subr.bf16.mxu0 0
    %1166 = vmatpush1.bf16.msra.mxu0 %v887
    %1167 = vmatprep.subr.bf16.mxu0 0
    %1168 = vmatpush1.bf16.msra.mxu0 %v886
    %1169 = vmatprep.subr.bf16.mxu0 0
    %1170 = vmatpush1.bf16.msra.mxu0 %v885
    %1171 = vmatprep.subr.bf16.mxu0 0
    %1172 = vmatpush1.bf16.msra.mxu0 %v884
    %1173 = vmatprep.subr.bf16.mxu0 0
    %1174 = vmatpush2.bf16.msra.mxu0 0
    %1175 = vmatprep.subr.bf16.mxu0 0
    %1176 = vmatpush2.bf16.msra.mxu0 0
    %1177 = vmatprep.subr.bf16.mxu0 0
    %1178 = vmatpush2.bf16.msra.mxu0 0
    %1179 = vmatprep.subr.bf16.mxu0 0
    %1180 = vmatpush2.bf16.msra.mxu0 0
    %1181 = vmatprep.subr.bf16.mxu0 0
    %1182 = vmatpush2.bf16.msra.mxu0 0
    %1183 = vmatprep.subr.bf16.mxu0 0
    %1184 = vmatpush2.bf16.msra.mxu0 0
    %1185 = vmatprep.subr.bf16.mxu0 0
    %1186 = vmatpush2.bf16.msra.mxu0 0
    %1187 = vmatprep.subr.bf16.mxu0 0
    %1188 = vmatpush2.bf16.msra.mxu0 0
    %1189 = vmatprep.mubr.bf16.mxu0 0
    %1190 = vmatmul.mubr.bf16.gmra.mxu0 %v1156
    %v1191 = vpop.f32.mrf.mxu0
    %v1192 = vadd.f32 %v850, %v1191
    %v1193 = vpop.f32.mrf.mxu0
    %v1194 = vpop.f32.mrf.mxu0
    %v1195 = vpop.f32.mrf.mxu0
    %1196 = vdwg.mxu0
    %1197 = vst [vmem:[#allocation12] sm:$0x3] %v1192
    %v1198 = vld [vmem:[#allocation7] sm:$0xff]
    %v1199 = vld [vmem:[#allocation7 + $0x8] sm:$0xff]
    %v1202 = vcombine.high %v1198, %v1198
    %v1204 = vunpack.c.l.s4 1983009808
    %v1205 = vunpack.c.0.s8 %v1204
    %v1206 = vlaneseq
    %v1207 = vshrl.u32 %v1206, 7
    %v1208 = vsub.s32 %v1205, %v1207
    %v1209 = vrot.slane %v1198, %v1208
    %v1211 = vunpack.c.l.s4 1983009808
    %v1212 = vunpack.c.0.s8 %v1211
    %v1213 = vlaneseq
    %v1214 = vshrl.u32 %v1213, 7
    %v1215 = vsub.s32 %v1212, %v1214
    %v1216 = vrot.slane %v1202, %v1215
    %v1217 = vcombine.high %v1209, %v1209
    %v1218 = vcombine.high %v1216, %v1216
    %v1219 = vcombine.high %v1199, %v1199
    %v1221 = vunpack.c.l.s4 1983009808
    %v1222 = vunpack.c.0.s8 %v1221
    %v1223 = vlaneseq
    %v1224 = vshrl.u32 %v1223, 7
    %v1225 = vsub.s32 %v1222, %v1224
    %v1226 = vrot.slane %v1199, %v1225
    %v1228 = vunpack.c.l.s4 1983009808
    %v1229 = vunpack.c.0.s8 %v1228
    %v1230 = vlaneseq
    %v1231 = vshrl.u32 %v1230, 7
    %v1232 = vsub.s32 %v1229, %v1231
    %v1233 = vrot.slane %v1219, %v1232
    %v1234 = vcombine.high %v1226, %v1226
    %v1235 = vcombine.high %v1233, %v1233
    %v1244 = vpack.c.bf16 %v1209, %v1209
    %v1245 = vpack.c.bf16 %v1217, %v1217
    %v1246 = vpack.c.bf16 %v1216, %v1216
    %v1247 = vpack.c.bf16 %v1218, %v1218
    %v1248 = vpack.c.bf16 %v1226, %v1226
    %v1249 = vpack.c.bf16 %v1234, %v1234
    %v1250 = vpack.c.bf16 %v1233, %v1233
    %v1251 = vpack.c.bf16 %v1235, %v1235
    %1252 = vmatprep.subr.bf16.mxu0 0
    %1253 = vmatpush1.bf16.msra.mxu0 %v563
    %1254 = vmatprep.subr.bf16.mxu0 0
    %1255 = vmatpush1.bf16.msra.mxu0 %v562
    %1256 = vmatprep.subr.bf16.mxu0 0
    %1257 = vmatpush1.bf16.msra.mxu0 %v561
    %1258 = vmatprep.subr.bf16.mxu0 0
    %1259 = vmatpush1.bf16.msra.mxu0 %v560
    %1260 = vmatprep.subr.bf16.mxu0 0
    %1261 = vmatpush1.bf16.msra.mxu0 %v559
    %1262 = vmatprep.subr.bf16.mxu0 0
    %1263 = vmatpush1.bf16.msra.mxu0 %v558
    %1264 = vmatprep.subr.bf16.mxu0 0
    %1265 = vmatpush1.bf16.msra.mxu0 %v557
    %1266 = vmatprep.subr.bf16.mxu0 0
    %1267 = vmatpush1.bf16.msra.mxu0 %v556
    %1268 = vmatprep.subr.bf16.mxu0 0
    %1269 = vmatpush2.bf16.msra.mxu0 %v571
    %1270 = vmatprep.subr.bf16.mxu0 0
    %1271 = vmatpush2.bf16.msra.mxu0 %v570
    %1272 = vmatprep.subr.bf16.mxu0 0
    %1273 = vmatpush2.bf16.msra.mxu0 %v569
    %1274 = vmatprep.subr.bf16.mxu0 0
    %1275 = vmatpush2.bf16.msra.mxu0 %v568
    %1276 = vmatprep.subr.bf16.mxu0 0
    %1277 = vmatpush2.bf16.msra.mxu0 %v567
    %1278 = vmatprep.subr.bf16.mxu0 0
    %1279 = vmatpush2.bf16.msra.mxu0 %v566
    %1280 = vmatprep.subr.bf16.mxu0 0
    %1281 = vmatpush2.bf16.msra.mxu0 %v565
    %1282 = vmatprep.subr.bf16.mxu0 0
    %1283 = vmatpush2.bf16.msra.mxu0 %v564
    %1284 = vmatprep.mubr.bf16.mxu0 %v1245
    %1285 = vmatmul.mubr.bf16.gmra.mxu0 %v1244
    %v1286 = vpop.f32.mrf.mxu0
    %v1287 = vadd.f32 %v298, %v1286
    %v1288 = vpop.f32.mrf.mxu0
    %v1289 = vpop.f32.mrf.mxu0
    %v1290 = vpop.f32.mrf.mxu0
    %1291 = vdwg.mxu0
    %1292 = vmatprep.subr.bf16.mxu0 0
    %1293 = vmatpush1.bf16.msra.mxu0 %v579
    %1294 = vmatprep.subr.bf16.mxu0 0
    %1295 = vmatpush1.bf16.msra.mxu0 %v578
    %1296 = vmatprep.subr.bf16.mxu0 0
    %1297 = vmatpush1.bf16.msra.mxu0 %v577
    %1298 = vmatprep.subr.bf16.mxu0 0
    %1299 = vmatpush1.bf16.msra.mxu0 %v576
    %1300 = vmatprep.subr.bf16.mxu0 0
    %1301 = vmatpush1.bf16.msra.mxu0 %v575
    %1302 = vmatprep.subr.bf16.mxu0 0
    %1303 = vmatpush1.bf16.msra.mxu0 %v574
    %1304 = vmatprep.subr.bf16.mxu0 0
    %1305 = vmatpush1.bf16.msra.mxu0 %v573
    %1306 = vmatprep.subr.bf16.mxu0 0
    %1307 = vmatpush1.bf16.msra.mxu0 %v572
    %1308 = vmatprep.subr.bf16.mxu0 0
    %1309 = vmatpush2.bf16.msra.mxu0 %v587
    %1310 = vmatprep.subr.bf16.mxu0 0
    %1311 = vmatpush2.bf16.msra.mxu0 %v586
    %1312 = vmatprep.subr.bf16.mxu0 0
    %1313 = vmatpush2.bf16.msra.mxu0 %v585
    %1314 = vmatprep.subr.bf16.mxu0 0
    %1315 = vmatpush2.bf16.msra.mxu0 %v584
    %1316 = vmatprep.subr.bf16.mxu0 0
    %1317 = vmatpush2.bf16.msra.mxu0 %v583
    %1318 = vmatprep.subr.bf16.mxu0 0
    %1319 = vmatpush2.bf16.msra.mxu0 %v582
    %1320 = vmatprep.subr.bf16.mxu0 0
    %1321 = vmatpush2.bf16.msra.mxu0 %v581
    %1322 = vmatprep.subr.bf16.mxu0 0
    %1323 = vmatpush2.bf16.msra.mxu0 %v580
    %1324 = vmatprep.mubr.bf16.mxu0 %v1247
    %1325 = vmatmul.mubr.bf16.gmra.mxu0 %v1246
    %v1326 = vpop.f32.mrf.mxu0
    %v1327 = vadd.f32 %v1287, %v1326
    %v1328 = vpop.f32.mrf.mxu0
    %v1329 = vpop.f32.mrf.mxu0
    %v1330 = vpop.f32.mrf.mxu0
    %1331 = vdwg.mxu0
    %1332 = vmatprep.subr.bf16.mxu0 0
    %1333 = vmatpush1.bf16.msra.mxu0 %v595
    %1334 = vmatprep.subr.bf16.mxu0 0
    %1335 = vmatpush1.bf16.msra.mxu0 %v594
    %1336 = vmatprep.subr.bf16.mxu0 0
    %1337 = vmatpush1.bf16.msra.mxu0 %v593
    %1338 = vmatprep.subr.bf16.mxu0 0
    %1339 = vmatpush1.bf16.msra.mxu0 %v592
    %1340 = vmatprep.subr.bf16.mxu0 0
    %1341 = vmatpush1.bf16.msra.mxu0 %v591
    %1342 = vmatprep.subr.bf16.mxu0 0
    %1343 = vmatpush1.bf16.msra.mxu0 %v590
    %1344 = vmatprep.subr.bf16.mxu0 0
    %1345 = vmatpush1.bf16.msra.mxu0 %v589
    %1346 = vmatprep.subr.bf16.mxu0 0
    %1347 = vmatpush1.bf16.msra.mxu0 %v588
    %1348 = vmatprep.subr.bf16.mxu0 0
    %1349 = vmatpush2.bf16.msra.mxu0 %v603
    %1350 = vmatprep.subr.bf16.mxu0 0
    %1351 = vmatpush2.bf16.msra.mxu0 %v602
    %1352 = vmatprep.subr.bf16.mxu0 0
    %1353 = vmatpush2.bf16.msra.mxu0 %v601
    %1354 = vmatprep.subr.bf16.mxu0 0
    %1355 = vmatpush2.bf16.msra.mxu0 %v600
    %1356 = vmatprep.subr.bf16.mxu0 0
    %1357 = vmatpush2.bf16.msra.mxu0 %v599
    %1358 = vmatprep.subr.bf16.mxu0 0
    %1359 = vmatpush2.bf16.msra.mxu0 %v598
    %1360 = vmatprep.subr.bf16.mxu0 0
    %1361 = vmatpush2.bf16.msra.mxu0 %v597
    %1362 = vmatprep.subr.bf16.mxu0 0
    %1363 = vmatpush2.bf16.msra.mxu0 %v596
    %1364 = vmatprep.mubr.bf16.mxu0 %v1249
    %1365 = vmatmul.mubr.bf16.gmra.mxu0 %v1248
    %v1366 = vpop.f32.mrf.mxu0
    %v1367 = vadd.f32 %v1327, %v1366
    %v1368 = vpop.f32.mrf.mxu0
    %v1369 = vpop.f32.mrf.mxu0
    %v1370 = vpop.f32.mrf.mxu0
    %1371 = vdwg.mxu0
    %1372 = vmatprep.subr.bf16.mxu0 0
    %1373 = vmatpush1.bf16.msra.mxu0 %v611
    %1374 = vmatprep.subr.bf16.mxu0 0
    %1375 = vmatpush1.bf16.msra.mxu0 %v610
    %1376 = vmatprep.subr.bf16.mxu0 0
    %1377 = vmatpush1.bf16.msra.mxu0 %v609
    %1378 = vmatprep.subr.bf16.mxu0 0
    %1379 = vmatpush1.bf16.msra.mxu0 %v608
    %1380 = vmatprep.subr.bf16.mxu0 0
    %1381 = vmatpush1.bf16.msra.mxu0 %v607
    %1382 = vmatprep.subr.bf16.mxu0 0
    %1383 = vmatpush1.bf16.msra.mxu0 %v606
    %1384 = vmatprep.subr.bf16.mxu0 0
    %1385 = vmatpush1.bf16.msra.mxu0 %v605
    %1386 = vmatprep.subr.bf16.mxu0 0
    %1387 = vmatpush1.bf16.msra.mxu0 %v604
    %1388 = vmatprep.subr.bf16.mxu0 0
    %1389 = vmatpush2.bf16.msra.mxu0 %v619
    %1390 = vmatprep.subr.bf16.mxu0 0
    %1391 = vmatpush2.bf16.msra.mxu0 %v618
    %1392 = vmatprep.subr.bf16.mxu0 0
    %1393 = vmatpush2.bf16.msra.mxu0 %v617
    %1394 = vmatprep.subr.bf16.mxu0 0
    %1395 = vmatpush2.bf16.msra.mxu0 %v616
    %1396 = vmatprep.subr.bf16.mxu0 0
    %1397 = vmatpush2.bf16.msra.mxu0 %v615
    %1398 = vmatprep.subr.bf16.mxu0 0
    %1399 = vmatpush2.bf16.msra.mxu0 %v614
    %1400 = vmatprep.subr.bf16.mxu0 0
    %1401 = vmatpush2.bf16.msra.mxu0 %v613
    %1402 = vmatprep.subr.bf16.mxu0 0
    %1403 = vmatpush2.bf16.msra.mxu0 %v612
    %1404 = vmatprep.mubr.bf16.mxu0 %v1251
    %1405 = vmatmul.mubr.bf16.gmra.mxu0 %v1250
    %v1406 = vpop.f32.mrf.mxu0
    %v1407 = vadd.f32 %v1367, %v1406
    %v1408 = vpop.f32.mrf.mxu0
    %v1409 = vpop.f32.mrf.mxu0
    %v1410 = vpop.f32.mrf.mxu0
    %1411 = vdwg.mxu0
    %v1412 = vmax.f32 %v1407, 0.0
    %v1413 = vpack.c.bf16 %v1412, %v1412
    %1414 = vmatprep.subr.bf16.mxu0 0
    %1415 = vmatpush1.bf16.msra.mxu0 %v891
    %1416 = vmatprep.subr.bf16.mxu0 0
    %1417 = vmatpush1.bf16.msra.mxu0 %v890
    %1418 = vmatprep.subr.bf16.mxu0 0
    %1419 = vmatpush1.bf16.msra.mxu0 %v889
    %1420 = vmatprep.subr.bf16.mxu0 0
    %1421 = vmatpush1.bf16.msra.mxu0 %v888
    %1422 = vmatprep.subr.bf16.mxu0 0
    %1423 = vmatpush1.bf16.msra.mxu0 %v887
    %1424 = vmatprep.subr.bf16.mxu0 0
    %1425 = vmatpush1.bf16.msra.mxu0 %v886
    %1426 = vmatprep.subr.bf16.mxu0 0
    %1427 = vmatpush1.bf16.msra.mxu0 %v885
    %1428 = vmatprep.subr.bf16.mxu0 0
    %1429 = vmatpush1.bf16.msra.mxu0 %v884
    %1430 = vmatprep.subr.bf16.mxu0 0
    %1431 = vmatpush2.bf16.msra.mxu0 0
    %1432 = vmatprep.subr.bf16.mxu0 0
    %1433 = vmatpush2.bf16.msra.mxu0 0
    %1434 = vmatprep.subr.bf16.mxu0 0
    %1435 = vmatpush2.bf16.msra.mxu0 0
    %1436 = vmatprep.subr.bf16.mxu0 0
    %1437 = vmatpush2.bf16.msra.mxu0 0
    %1438 = vmatprep.subr.bf16.mxu0 0
    %1439 = vmatpush2.bf16.msra.mxu0 0
    %1440 = vmatprep.subr.bf16.mxu0 0
    %1441 = vmatpush2.bf16.msra.mxu0 0
    %1442 = vmatprep.subr.bf16.mxu0 0
    %1443 = vmatpush2.bf16.msra.mxu0 0
    %1444 = vmatprep.subr.bf16.mxu0 0
    %1445 = vmatpush2.bf16.msra.mxu0 0
    %1446 = vmatprep.mubr.bf16.mxu0 0
    %1447 = vmatmul.mubr.bf16.gmra.mxu0 %v1413
    %v1448 = vpop.f32.mrf.mxu0
    %v1449 = vadd.f32 %v850, %v1448
    %v1450 = vpop.f32.mrf.mxu0
    %v1451 = vpop.f32.mrf.mxu0
    %v1452 = vpop.f32.mrf.mxu0
    %1453 = vdwg.mxu0
    %1454 = vst [vmem:[#allocation14] sm:$0x3] %v1449
    // Predicated region
    $region50: #{tpu_custom_call.1} parent=1 // pred_check
      _
    $region51: #{tpu_custom_call.1} parent=1 // pred_check_branch
      %1456 = sbr.rel (0) target = $region53
    $region52: #{tpu_custom_call.1} parent=1 // pred_region
      %s1458 = ssub.s32 32, 32
      %1459 = vsyncadd [#allocation4], %s1458
      %s1461 = sshll.u32 [#allocation11], 4
      %s1462 = int_to_ptr.vmem [resolvable:$true] %s1461
      %1464 = dma.vmem_to_hbm [thread:$0]  %s1462, 32, %s7, [#allocation4]
    $region53: #{tpu_custom_call.1} parent=1 // pred_fallthru
      _
    // Predicated region
    $region54: #{tpu_custom_call.1} parent=1 // pred_check
      _
    $region55: #{tpu_custom_call.1} parent=1 // pred_check_branch
      %1466 = sbr.rel (0) target = $region57
    $region56: #{tpu_custom_call.1} parent=1 // pred_region
      %s1468 = ssub.s32 32, 32
      %1469 = vsyncadd [#allocation13], %s1468
      %s1471 = sshll.u32 [#allocation12], 4
      %s1472 = int_to_ptr.vmem [resolvable:$true] %s1471
      %1474 = dma.vmem_to_hbm [thread:$0]  %s1472, 32, %s8, [#allocation13]
    $region57: #{tpu_custom_call.1} parent=1 // pred_fallthru
      _
    // Predicated region
    $region58: #{tpu_custom_call.1} parent=1 // pred_check
      _
    $region59: #{tpu_custom_call.1} parent=1 // pred_check_branch
      %1476 = sbr.rel (0) target = $region61
    $region60: #{tpu_custom_call.1} parent=1 // pred_region
      %s1478 = ssub.s32 32, 32
      %1479 = vsyncadd [#allocation13], %s1478
      %s1481 = sshll.u32 [#allocation14], 4
      %s1482 = int_to_ptr.vmem [resolvable:$true] %s1481
      %1484 = dma.vmem_to_hbm [thread:$0]  %s1482, 32, %s9, [#allocation13]
    $region61: #{tpu_custom_call.1} parent=1 // pred_fallthru
      _
    // Predicated region
    $region62: #{tpu_custom_call.1} parent=1 // pred_check
      _
    $region63: #{tpu_custom_call.1} parent=1 // pred_check_branch
      %1486 = sbr.rel (0) target = $region65
    $region64: #{tpu_custom_call.1} parent=1 // pred_region
      %1487 = dma.done [#allocation4], 32
    $region65: #{tpu_custom_call.1} parent=1 // pred_fallthru
      _
    // Predicated region
    $region66: #{tpu_custom_call.1} parent=1 // pred_check
      _
    $region67: #{tpu_custom_call.1} parent=1 // pred_check_branch
      %1489 = sbr.rel (0) target = $region69
    $region68: #{tpu_custom_call.1} parent=1 // pred_region
      %1490 = dma.done [#allocation13], 32
    $region69: #{tpu_custom_call.1} parent=1 // pred_fallthru
      _
    // Predicated region
    $region70: #{tpu_custom_call.1} parent=1 // pred_check
      _
    $region71: #{tpu_custom_call.1} parent=1 // pred_check_branch
      %1492 = sbr.rel (0) target = $region73
    $region72: #{tpu_custom_call.1} parent=1 // pred_region
      %1493 = dma.done [#allocation13], 32
    $region73: #{tpu_custom_call.1} parent=1 // pred_fallthru
      _
    %1494 = vsyncpa [#allocation3], 1
    %1495 = vsyncpa [#allocation6], 1
    %1496 = vsyncpa [#allocation9], 1
    %1497 = vsyncpa [#allocation4], 1
    %1498 = vsyncpa [#allocation13], 1

</llo_original>
